<compile_context>
chip_gen: v6e
topology: v6e:2x2x1
jax: 0.10.0
libtpu: 0.0.40
codegen_flags: <defaults>
</compile_context>

<pallas_src>
import jax
import jax.numpy as jnp
from jax.experimental import pallas as pl
from jax.experimental.pallas import tpu as pltpu

LANE = 128
SUBLANE = 8


def _round_up(x, m):
    return (x + m - 1) // m * m


def _mxu_align():
    """256-lane alignment for v6e/v7x MXU geometry, 128 for earlier chips."""
    try:
        kind = jax.devices()[0].device_kind.lower()
    except Exception:
        return 128
    return 256 if ("v6" in kind or "v7" in kind) else 128


def botnet_kernel(x_ref,
                  w_in_ref, b_in_ref,
                  w_h0_ref, b_h0_ref,
                  w_h1_ref, b_h1_ref,
                  w_out_ref, b_out_ref,
                  o_ref):
    """Fused MLP forward for one batch tile; all weights VMEM-resident."""
    # input_layer + ReLU. x arrives bf16; MXU accumulates in f32, add the f32
    # bias, ReLU, then cast to bf16 in the epilogue so the live activation
    # slab between layers is half-size.
    h = jnp.dot(x_ref[...], w_in_ref[...], preferred_element_type=jnp.float32)
    h = jnp.maximum(h + b_in_ref[...], 0.0).astype(jnp.bfloat16)

    # hidden layer 0 + ReLU (+ dropout = identity in eval mode)
    h = jnp.dot(h, w_h0_ref[...], preferred_element_type=jnp.float32)
    h = jnp.maximum(h + b_h0_ref[...], 0.0).astype(jnp.bfloat16)

    # hidden layer 1 + ReLU (+ dropout = identity in eval mode)
    h = jnp.dot(h, w_h1_ref[...], preferred_element_type=jnp.float32)
    h = jnp.maximum(h + b_h1_ref[...], 0.0).astype(jnp.bfloat16)

    # output_layer (no activation)
    out = jnp.dot(h, w_out_ref[...], preferred_element_type=jnp.float32)
    o_ref[...] = (out + b_out_ref[...]).astype(o_ref.dtype)


def botnet_forward(x, params, tile_b=1024):
    """x: [B, input_size]; params: dict of f32 weights/biases.

    Weights are [in_features, out_features] (transposed vs. nn.Linear.weight);
    biases are [1, out_features]. Dropout(0.2) uses eval-mode semantics.
    """
    B, input_size = x.shape
    hidden_size = params["w_in"].shape[1]
    output_size = params["w_out"].shape[1]

    mxu = _mxu_align()
    h_pad = _round_up(hidden_size, mxu)
    # Tiny output heads: padding to 128 f32 lanes would inflate HBM writeback
    # up to 32x, so keep them unpadded (masked stores are cheap at this size).
    out_pad = output_size if output_size <= LANE else _round_up(output_size, LANE)

    dh = h_pad - hidden_size
    do = out_pad - output_size

    # bf16 weights at rest (half the resident VMEM, MXU-native); biases stay
    # f32 and are added after the f32 accumulation. Zero-padding the hidden
    # dim is numerically inert (padded cols stay 0 through bias+ReLU, and the
    # padded rows of the next weight are 0).
    w_in = jnp.pad(params["w_in"], ((0, 0), (0, dh))).astype(jnp.bfloat16)
    b_in = jnp.pad(params["b_in"], ((0, 0), (0, dh)))
    w_h0 = jnp.pad(params["w_h0"], ((0, dh), (0, dh))).astype(jnp.bfloat16)
    b_h0 = jnp.pad(params["b_h0"], ((0, 0), (0, dh)))
    w_h1 = jnp.pad(params["w_h1"], ((0, dh), (0, dh))).astype(jnp.bfloat16)
    b_h1 = jnp.pad(params["b_h1"], ((0, 0), (0, dh)))
    w_out = jnp.pad(params["w_out"], ((0, dh), (0, do))).astype(jnp.bfloat16)
    b_out = jnp.pad(params["b_out"], ((0, 0), (0, do)))

    weights = (w_in, b_in, w_h0, b_h0, w_h1, b_h1, w_out, b_out)
    resident_bytes = sum(int(a.size) * a.dtype.itemsize for a in weights)

    # x streamed as bf16 at rest: it is the only large streamed input, so this
    # halves the dominant HBM->VMEM traffic (kernel already feeds MXU in bf16).
    x = x.astype(jnp.bfloat16)

    # --- batch tiling / VMEM budget ----------------------------------------
    def step_bytes(tb):
        x_buf = 2 * tb * input_size * 2          # bf16 x tile, double-buffered
        o_buf = 2 * tb * out_pad * 4             # f32 out tile, double-buffered
        act = 3 * tb * h_pad * 4                 # live activation slabs (generous)
        return x_buf + o_buf + act

    VMEM_BUDGET = 48 << 20   # stay well under v7x's 64 MiB per-TC VMEM
    # TODO(synk): if resident_bytes alone approaches the budget (very large
    # hidden sizes on v7x), switch to a K/N-tiled grid axis ("arbitrary") with
    # a pl.when-initialized accumulator instead of fully-resident weights.

    TILE_B = _round_up(min(max(B, SUBLANE), tile_b), SUBLANE)
    while TILE_B > SUBLANE and resident_bytes + step_bytes(TILE_B) > VMEM_BUDGET:
        TILE_B = max(SUBLANE, _round_up(TILE_B // 2, SUBLANE))

    # Guarantee >= 2 grid steps: lets the "parallel" batch axis shard across
    # both v7x TensorCores and gives the pipeliner neighbour tiles to hide the
    # x DMA-in / out DMA-back behind.
    if pl.cdiv(B, TILE_B) < 2:
        TILE_B = max(SUBLANE, _round_up(pl.cdiv(B, 2), SUBLANE))
    num_steps = max(2, pl.cdiv(B, TILE_B))
    padded_B = num_steps * TILE_B
    if padded_B != B:
        x = jnp.pad(x, ((0, padded_B - B), (0, 0)))
    grid = (num_steps,)

    vmem_limit = int(resident_bytes + step_bytes(TILE_B)) + (4 << 20)
    vmem_limit = min(max(vmem_limit, 32 << 20), 64 << 20)

    out_shape = jax.ShapeDtypeStruct((padded_B, out_pad), jnp.float32)
    out_spec = pl.BlockSpec((TILE_B, out_pad), lambda i: (i, 0))
    x_spec = pl.BlockSpec((TILE_B, input_size), lambda i: (i, 0))

    def resident_spec(arr, single_buffer):
        shape = arr.shape
        if single_buffer:
            # Constant index_map -> no need to double-buffer; halves the
            # resident weight footprint in VMEM.
            return pl.BlockSpec(shape, lambda i: (0, 0),
                                pipeline_mode=pl.Buffered(1))
        return pl.BlockSpec(shape, lambda i: (0, 0))

    def run(single_buffer):
        in_specs = [x_spec] + [resident_spec(a, single_buffer) for a in weights]
        return pl.pallas_call(
            botnet_kernel,
            out_shape=out_shape,
            grid=grid,
            in_specs=in_specs,
            out_specs=out_spec,
            compiler_params=pltpu.CompilerParams(
                dimension_semantics=("parallel",),
                vmem_limit_bytes=vmem_limit),
        )(x, *weights)

    try:
        out = run(single_buffer=True)
    except Exception:
        # Fallback: default double-buffered residents if this JAX build rejects
        # pl.Buffered(1) on pallas_call BlockSpecs (correctness unaffected).
        out = run(single_buffer=False)

    return out[:B, :output_size]


def init_params(key, input_size, hidden_size, output_size):
    """Deterministic init mimicking nn.Linear's U(-1/sqrt(fan_in), 1/sqrt(fan_in))."""
    def linear(key, fan_in, fan_out):
        kw, kb = jax.random.split(key)
        bound = 1.0 / jnp.sqrt(jnp.float32(fan_in))
        w = jax.random.uniform(kw, (fan_in, fan_out), jnp.float32, -bound, bound)
        b = jax.random.uniform(kb, (1, fan_out), jnp.float32, -bound, bound)
        return w, b

    k0, k1, k2, k3 = jax.random.split(key, 4)
    w_in, b_in = linear(k0, input_size, hidden_size)
    w_h0, b_h0 = linear(k1, hidden_size, hidden_size)
    w_h1, b_h1 = linear(k2, hidden_size, hidden_size)
    w_out, b_out = linear(k3, hidden_size, output_size)
    return {
        "w_in": w_in, "b_in": b_in,
        "w_h0": w_h0, "b_h0": b_h0,
        "w_h1": w_h1, "b_h1": b_h1,
        "w_out": w_out, "b_out": b_out,
    }


if __name__ == "__main__":
    input_size, hidden_size, output_size = 16, 32, 4
    batch = 8

    key = jax.random.PRNGKey(0)
    kx, kp = jax.random.split(key)

    x = jax.random.normal(kx, (batch, input_size), jnp.float32)
    params = init_params(kp, input_size, hidden_size, output_size)

    out = botnet_forward(x, params)
    out = jax.block_until_ready(out)

    # Pure-JAX reference using the same bf16-input / f32-accumulate matmul path
    # (eval-mode dropout = identity).
    def ref(x, p):
        def lin(h, w, b):
            return jnp.dot(h.astype(jnp.bfloat16), w.astype(jnp.bfloat16),
                           preferred_element_type=jnp.float32) + b
        h = jnp.maximum(lin(x, p["w_in"], p["b_in"]), 0.0)
        h = jnp.maximum(lin(h, p["w_h0"], p["b_h0"]), 0.0)
        h = jnp.maximum(lin(h, p["w_h1"], p["b_h1"]), 0.0)
        return lin(h, p["w_out"], p["b_out"])

    expected = ref(x, params)
    assert out.shape == (batch, output_size)
    assert jnp.allclose(out, expected, atol=1e-2, rtol=1e-2), (
        float(jnp.max(jnp.abs(out - expected))))

    print("KERNEL_OK")
</pallas_src>

<mosaic_0001>
module attributes {stable_mosaic.version = 11 : i64} {
  func.func @botnet_kernel(%arg0: i32, %arg1: memref<8x16xbf16, #tpu.memory_space<vmem>>, %arg2: memref<16x128xbf16, #tpu.memory_space<vmem>>, %arg3: memref<1x128xf32, #tpu.memory_space<vmem>>, %arg4: memref<128x128xbf16, #tpu.memory_space<vmem>>, %arg5: memref<1x128xf32, #tpu.memory_space<vmem>>, %arg6: memref<128x128xbf16, #tpu.memory_space<vmem>>, %arg7: memref<1x128xf32, #tpu.memory_space<vmem>>, %arg8: memref<128x4xbf16, #tpu.memory_space<vmem>>, %arg9: memref<1x4xf32, #tpu.memory_space<vmem>>, %arg10: memref<8x4xf32, #tpu.memory_space<vmem>>) attributes {dimension_semantics = [#tpu.dimension_semantics<parallel>], iteration_bounds = array<i64: 2>, scalar_prefetch = 0 : i64, scratch_operands = 0 : i64, tpu.core_type = #tpu.core_type<tc>, window_params = [{transform_indices = @transform_0, window_bounds = array<i64: 8, 16>}, {pipeline_mode = #tpu.pipeline_mode<synchronous>, transform_indices = @transform_1, window_bounds = array<i64: 16, 128>}, {pipeline_mode = #tpu.pipeline_mode<synchronous>, transform_indices = @transform_2, window_bounds = array<i64: 1, 128>}, {pipeline_mode = #tpu.pipeline_mode<synchronous>, transform_indices = @transform_3, window_bounds = array<i64: 128, 128>}, {pipeline_mode = #tpu.pipeline_mode<synchronous>, transform_indices = @transform_4, window_bounds = array<i64: 1, 128>}, {pipeline_mode = #tpu.pipeline_mode<synchronous>, transform_indices = @transform_5, window_bounds = array<i64: 128, 128>}, {pipeline_mode = #tpu.pipeline_mode<synchronous>, transform_indices = @transform_6, window_bounds = array<i64: 1, 128>}, {pipeline_mode = #tpu.pipeline_mode<synchronous>, transform_indices = @transform_7, window_bounds = array<i64: 128, 4>}, {pipeline_mode = #tpu.pipeline_mode<synchronous>, transform_indices = @transform_8, window_bounds = array<i64: 1, 4>}, {transform_indices = @transform_9, window_bounds = array<i64: 8, 4>}]} {
    %c0 = arith.constant 0 : index
    %c0_0 = arith.constant 0 : index
    %0 = vector.load %arg1[%c0, %c0_0] : memref<8x16xbf16, #tpu.memory_space<vmem>>, vector<8x16xbf16>
    %c0_1 = arith.constant 0 : index
    %c0_2 = arith.constant 0 : index
    %1 = vector.load %arg2[%c0_1, %c0_2] : memref<16x128xbf16, #tpu.memory_space<vmem>>, vector<16x128xbf16>
    %cst = arith.constant dense<0.000000e+00> : vector<8x128xf32>
    %2 = tpu.matmul %0, %1, %cst {dimension_numbers = #tpu.dot_dimension_numbers<[1], [0], [0], [1], [0, 0, 1, 1], [], []>} : vector<8x16xbf16>, vector<16x128xbf16>, vector<8x128xf32> -> vector<8x128xf32>
    %c0_3 = arith.constant 0 : index
    %c0_4 = arith.constant 0 : index
    %3 = vector.load %arg3[%c0_3, %c0_4] : memref<1x128xf32, #tpu.memory_space<vmem>>, vector<1x128xf32>
    %4 = vector.broadcast %3 : vector<1x128xf32> to vector<8x128xf32>
    %5 = arith.addf %2, %4 : vector<8x128xf32>
    %cst_5 = arith.constant 0.000000e+00 : f32
    %6 = vector.broadcast %cst_5 : f32 to vector<8x128xf32>
    %7 = arith.maximumf %5, %6 : vector<8x128xf32>
    %8 = arith.truncf %7 : vector<8x128xf32> to vector<8x128xbf16>
    %c0_6 = arith.constant 0 : index
    %c0_7 = arith.constant 0 : index
    %9 = vector.load %arg4[%c0_6, %c0_7] : memref<128x128xbf16, #tpu.memory_space<vmem>>, vector<128x128xbf16>
    %cst_8 = arith.constant dense<0.000000e+00> : vector<8x128xf32>
    %10 = tpu.matmul %8, %9, %cst_8 {dimension_numbers = #tpu.dot_dimension_numbers<[1], [0], [0], [1], [0, 0, 1, 1], [], []>} : vector<8x128xbf16>, vector<128x128xbf16>, vector<8x128xf32> -> vector<8x128xf32>
    %c0_9 = arith.constant 0 : index
    %c0_10 = arith.constant 0 : index
    %11 = vector.load %arg5[%c0_9, %c0_10] : memref<1x128xf32, #tpu.memory_space<vmem>>, vector<1x128xf32>
    %12 = vector.broadcast %11 : vector<1x128xf32> to vector<8x128xf32>
    %13 = arith.addf %10, %12 : vector<8x128xf32>
    %cst_11 = arith.constant 0.000000e+00 : f32
    %14 = vector.broadcast %cst_11 : f32 to vector<8x128xf32>
    %15 = arith.maximumf %13, %14 : vector<8x128xf32>
    %16 = arith.truncf %15 : vector<8x128xf32> to vector<8x128xbf16>
    %c0_12 = arith.constant 0 : index
    %c0_13 = arith.constant 0 : index
    %17 = vector.load %arg6[%c0_12, %c0_13] : memref<128x128xbf16, #tpu.memory_space<vmem>>, vector<128x128xbf16>
    %cst_14 = arith.constant dense<0.000000e+00> : vector<8x128xf32>
    %18 = tpu.matmul %16, %17, %cst_14 {dimension_numbers = #tpu.dot_dimension_numbers<[1], [0], [0], [1], [0, 0, 1, 1], [], []>} : vector<8x128xbf16>, vector<128x128xbf16>, vector<8x128xf32> -> vector<8x128xf32>
    %c0_15 = arith.constant 0 : index
    %c0_16 = arith.constant 0 : index
    %19 = vector.load %arg7[%c0_15, %c0_16] : memref<1x128xf32, #tpu.memory_space<vmem>>, vector<1x128xf32>
    %20 = vector.broadcast %19 : vector<1x128xf32> to vector<8x128xf32>
    %21 = arith.addf %18, %20 : vector<8x128xf32>
    %cst_17 = arith.constant 0.000000e+00 : f32
    %22 = vector.broadcast %cst_17 : f32 to vector<8x128xf32>
    %23 = arith.maximumf %21, %22 : vector<8x128xf32>
    %24 = arith.truncf %23 : vector<8x128xf32> to vector<8x128xbf16>
    %c0_18 = arith.constant 0 : index
    %c0_19 = arith.constant 0 : index
    %25 = vector.load %arg8[%c0_18, %c0_19] : memref<128x4xbf16, #tpu.memory_space<vmem>>, vector<128x4xbf16>
    %cst_20 = arith.constant dense<0.000000e+00> : vector<8x4xf32>
    %26 = tpu.matmul %24, %25, %cst_20 {dimension_numbers = #tpu.dot_dimension_numbers<[1], [0], [0], [1], [0, 0, 1, 1], [], []>} : vector<8x128xbf16>, vector<128x4xbf16>, vector<8x4xf32> -> vector<8x4xf32>
    %c0_21 = arith.constant 0 : index
    %c0_22 = arith.constant 0 : index
    %27 = vector.load %arg9[%c0_21, %c0_22] : memref<1x4xf32, #tpu.memory_space<vmem>>, vector<1x4xf32>
    %28 = vector.broadcast %27 : vector<1x4xf32> to vector<8x4xf32>
    %29 = arith.addf %26, %28 : vector<8x4xf32>
    %c0_23 = arith.constant 0 : index
    %c0_24 = arith.constant 0 : index
    %30 = vector.load %arg10[%c0_23, %c0_24] : memref<8x4xf32, #tpu.memory_space<vmem>>, vector<8x4xf32>
    tpu.vector_store %arg10[%c0_23, %c0_24], %29 {strides = array<i32>} : memref<8x4xf32, #tpu.memory_space<vmem>>, vector<8x4xf32>,
    return
  }
  func.func @transform_0(%arg0: i32) -> (i32, i32) {
    %c0_i32 = arith.constant 0 : i32
    %c0_i32_0 = arith.constant 0 : i32
    return %arg0, %c0_i32 : i32, i32
  }
  func.func @transform_1(%arg0: i32) -> (i32, i32) {
    %c0_i32 = arith.constant 0 : i32
    %c0_i32_0 = arith.constant 0 : i32
    %c0_i32_1 = arith.constant 0 : i32
    return %c0_i32, %c0_i32_0 : i32, i32
  }
  func.func @transform_2(%arg0: i32) -> (i32, i32) {
    %c0_i32 = arith.constant 0 : i32
    %c0_i32_0 = arith.constant 0 : i32
    %c0_i32_1 = arith.constant 0 : i32
    return %c0_i32, %c0_i32_0 : i32, i32
  }
  func.func @transform_3(%arg0: i32) -> (i32, i32) {
    %c0_i32 = arith.constant 0 : i32
    %c0_i32_0 = arith.constant 0 : i32
    %c0_i32_1 = arith.constant 0 : i32
    return %c0_i32, %c0_i32_0 : i32, i32
  }
  func.func @transform_4(%arg0: i32) -> (i32, i32) {
    %c0_i32 = arith.constant 0 : i32
    %c0_i32_0 = arith.constant 0 : i32
    %c0_i32_1 = arith.constant 0 : i32
    return %c0_i32, %c0_i32_0 : i32, i32
  }
  func.func @transform_5(%arg0: i32) -> (i32, i32) {
    %c0_i32 = arith.constant 0 : i32
    %c0_i32_0 = arith.constant 0 : i32
    %c0_i32_1 = arith.constant 0 : i32
    return %c0_i32, %c0_i32_0 : i32, i32
  }
  func.func @transform_6(%arg0: i32) -> (i32, i32) {
    %c0_i32 = arith.constant 0 : i32
    %c0_i32_0 = arith.constant 0 : i32
    %c0_i32_1 = arith.constant 0 : i32
    return %c0_i32, %c0_i32_0 : i32, i32
  }
  func.func @transform_7(%arg0: i32) -> (i32, i32) {
    %c0_i32 = arith.constant 0 : i32
    %c0_i32_0 = arith.constant 0 : i32
    %c0_i32_1 = arith.constant 0 : i32
    return %c0_i32, %c0_i32_0 : i32, i32
  }
  func.func @transform_8(%arg0: i32) -> (i32, i32) {
    %c0_i32 = arith.constant 0 : i32
    %c0_i32_0 = arith.constant 0 : i32
    %c0_i32_1 = arith.constant 0 : i32
    return %c0_i32, %c0_i32_0 : i32, i32
  }
  func.func @transform_9(%arg0: i32) -> (i32, i32) {
    %c0_i32 = arith.constant 0 : i32
    %c0_i32_0 = arith.constant 0 : i32
    return %arg0, %c0_i32 : i32, i32
  }
}

module attributes {stable_mosaic.version = 11 : i64} {
  func.func @botnet_kernel(%arg0: i32, %arg1: memref<8x16xbf16, #tpu.memory_space<vmem>>, %arg2: memref<16x128xbf16, #tpu.memory_space<vmem>>, %arg3: memref<1x128xf32, #tpu.memory_space<vmem>>, %arg4: memref<128x128xbf16, #tpu.memory_space<vmem>>, %arg5: memref<1x128xf32, #tpu.memory_space<vmem>>, %arg6: memref<128x128xbf16, #tpu.memory_space<vmem>>, %arg7: memref<1x128xf32, #tpu.memory_space<vmem>>, %arg8: memref<128x4xbf16, #tpu.memory_space<vmem>>, %arg9: memref<1x4xf32, #tpu.memory_space<vmem>>, %arg10: memref<8x4xf32, #tpu.memory_space<vmem>>) attributes {dimension_semantics = [#tpu.dimension_semantics<parallel>], iteration_bounds = array<i64: 2>, scalar_prefetch = 0 : i64, scratch_operands = 0 : i64, tpu.core_type = #tpu.core_type<tc>, window_params = [{transform_indices = @transform_0, window_bounds = array<i64: 8, 16>}, {pipeline_mode = #tpu.pipeline_mode<synchronous>, transform_indices = @transform_1, window_bounds = array<i64: 16, 128>}, {pipeline_mode = #tpu.pipeline_mode<synchronous>, transform_indices = @transform_2, window_bounds = array<i64: 1, 128>}, {pipeline_mode = #tpu.pipeline_mode<synchronous>, transform_indices = @transform_3, window_bounds = array<i64: 128, 128>}, {pipeline_mode = #tpu.pipeline_mode<synchronous>, transform_indices = @transform_4, window_bounds = array<i64: 1, 128>}, {pipeline_mode = #tpu.pipeline_mode<synchronous>, transform_indices = @transform_5, window_bounds = array<i64: 128, 128>}, {pipeline_mode = #tpu.pipeline_mode<synchronous>, transform_indices = @transform_6, window_bounds = array<i64: 1, 128>}, {pipeline_mode = #tpu.pipeline_mode<synchronous>, transform_indices = @transform_7, window_bounds = array<i64: 128, 4>}, {pipeline_mode = #tpu.pipeline_mode<synchronous>, transform_indices = @transform_8, window_bounds = array<i64: 1, 4>}, {transform_indices = @transform_9, window_bounds = array<i64: 8, 4>}]} {
    %c0 = arith.constant 0 : index
    %c0_0 = arith.constant 0 : index
    %0 = vector.load %arg1[%c0, %c0_0] : memref<8x16xbf16, #tpu.memory_space<vmem>>, vector<8x16xbf16>
    %c0_1 = arith.constant 0 : index
    %c0_2 = arith.constant 0 : index
    %1 = vector.load %arg2[%c0_1, %c0_2] : memref<16x128xbf16, #tpu.memory_space<vmem>>, vector<16x128xbf16>
    %cst = arith.constant dense<0.000000e+00> : vector<8x128xf32>
    %2 = tpu.matmul %0, %1, %cst {dimension_numbers = #tpu.dot_dimension_numbers<[1], [0], [0], [1], [0, 0, 1, 1], [], []>} : vector<8x16xbf16>, vector<16x128xbf16>, vector<8x128xf32> -> vector<8x128xf32>
    %c0_3 = arith.constant 0 : index
    %c0_4 = arith.constant 0 : index
    %3 = vector.load %arg3[%c0_3, %c0_4] : memref<1x128xf32, #tpu.memory_space<vmem>>, vector<1x128xf32>
    %4 = vector.broadcast %3 : vector<1x128xf32> to vector<8x128xf32>
    %5 = arith.addf %2, %4 : vector<8x128xf32>
    %cst_5 = arith.constant 0.000000e+00 : f32
    %6 = vector.broadcast %cst_5 : f32 to vector<8x128xf32>
    %7 = arith.maximumf %5, %6 : vector<8x128xf32>
    %8 = arith.truncf %7 : vector<8x128xf32> to vector<8x128xbf16>
    %c0_6 = arith.constant 0 : index
    %c0_7 = arith.constant 0 : index
    %9 = vector.load %arg4[%c0_6, %c0_7] : memref<128x128xbf16, #tpu.memory_space<vmem>>, vector<128x128xbf16>
    %cst_8 = arith.constant dense<0.000000e+00> : vector<8x128xf32>
    %10 = tpu.matmul %8, %9, %cst_8 {dimension_numbers = #tpu.dot_dimension_numbers<[1], [0], [0], [1], [0, 0, 1, 1], [], []>} : vector<8x128xbf16>, vector<128x128xbf16>, vector<8x128xf32> -> vector<8x128xf32>
    %c0_9 = arith.constant 0 : index
    %c0_10 = arith.constant 0 : index
    %11 = vector.load %arg5[%c0_9, %c0_10] : memref<1x128xf32, #tpu.memory_space<vmem>>, vector<1x128xf32>
    %12 = vector.broadcast %11 : vector<1x128xf32> to vector<8x128xf32>
    %13 = arith.addf %10, %12 : vector<8x128xf32>
    %cst_11 = arith.constant 0.000000e+00 : f32
    %14 = vector.broadcast %cst_11 : f32 to vector<8x128xf32>
    %15 = arith.maximumf %13, %14 : vector<8x128xf32>
    %16 = arith.truncf %15 : vector<8x128xf32> to vector<8x128xbf16>
    %c0_12 = arith.constant 0 : index
    %c0_13 = arith.constant 0 : index
    %17 = vector.load %arg6[%c0_12, %c0_13] : memref<128x128xbf16, #tpu.memory_space<vmem>>, vector<128x128xbf16>
    %cst_14 = arith.constant dense<0.000000e+00> : vector<8x128xf32>
    %18 = tpu.matmul %16, %17, %cst_14 {dimension_numbers = #tpu.dot_dimension_numbers<[1], [0], [0], [1], [0, 0, 1, 1], [], []>} : vector<8x128xbf16>, vector<128x128xbf16>, vector<8x128xf32> -> vector<8x128xf32>
    %c0_15 = arith.constant 0 : index
    %c0_16 = arith.constant 0 : index
    %19 = vector.load %arg7[%c0_15, %c0_16] : memref<1x128xf32, #tpu.memory_space<vmem>>, vector<1x128xf32>
    %20 = vector.broadcast %19 : vector<1x128xf32> to vector<8x128xf32>
    %21 = arith.addf %18, %20 : vector<8x128xf32>
    %cst_17 = arith.constant 0.000000e+00 : f32
    %22 = vector.broadcast %cst_17 : f32 to vector<8x128xf32>
    %23 = arith.maximumf %21, %22 : vector<8x128xf32>
    %24 = arith.truncf %23 : vector<8x128xf32> to vector<8x128xbf16>
    %c0_18 = arith.constant 0 : index
    %c0_19 = arith.constant 0 : index
    %25 = vector.load %arg8[%c0_18, %c0_19] : memref<128x4xbf16, #tpu.memory_space<vmem>>, vector<128x4xbf16>
    %cst_20 = arith.constant dense<0.000000e+00> : vector<8x4xf32>
    %26 = tpu.matmul %24, %25, %cst_20 {dimension_numbers = #tpu.dot_dimension_numbers<[1], [0], [0], [1], [0, 0, 1, 1], [], []>} : vector<8x128xbf16>, vector<128x4xbf16>, vector<8x4xf32> -> vector<8x4xf32>
    %c0_21 = arith.constant 0 : index
    %c0_22 = arith.constant 0 : index
    %27 = vector.load %arg9[%c0_21, %c0_22] : memref<1x4xf32, #tpu.memory_space<vmem>>, vector<1x4xf32>
    %28 = vector.broadcast %27 : vector<1x4xf32> to vector<8x4xf32>
    %29 = arith.addf %26, %28 : vector<8x4xf32>
    %c0_23 = arith.constant 0 : index
    %c0_24 = arith.constant 0 : index
    %30 = vector.load %arg10[%c0_23, %c0_24] : memref<8x4xf32, #tpu.memory_space<vmem>>, vector<8x4xf32>
    tpu.vector_store %arg10[%c0_23, %c0_24], %29 {strides = array<i32>} : memref<8x4xf32, #tpu.memory_space<vmem>>, vector<8x4xf32>,
    return
  }
  func.func @transform_0(%arg0: i32) -> (i32, i32) {
    %c0_i32 = arith.constant 0 : i32
    %c0_i32_0 = arith.constant 0 : i32
    return %arg0, %c0_i32 : i32, i32
  }
  func.func @transform_1(%arg0: i32) -> (i32, i32) {
    %c0_i32 = arith.constant 0 : i32
    %c0_i32_0 = arith.constant 0 : i32
    %c0_i32_1 = arith.constant 0 : i32
    return %c0_i32, %c0_i32_0 : i32, i32
  }
  func.func @transform_2(%arg0: i32) -> (i32, i32) {
    %c0_i32 = arith.constant 0 : i32
    %c0_i32_0 = arith.constant 0 : i32
    %c0_i32_1 = arith.constant 0 : i32
    return %c0_i32, %c0_i32_0 : i32, i32
  }
  func.func @transform_3(%arg0: i32) -> (i32, i32) {
    %c0_i32 = arith.constant 0 : i32
    %c0_i32_0 = arith.constant 0 : i32
    %c0_i32_1 = arith.constant 0 : i32
    return %c0_i32, %c0_i32_0 : i32, i32
  }
  func.func @transform_4(%arg0: i32) -> (i32, i32) {
    %c0_i32 = arith.constant 0 : i32
    %c0_i32_0 = arith.constant 0 : i32
    %c0_i32_1 = arith.constant 0 : i32
    return %c0_i32, %c0_i32_0 : i32, i32
  }
  func.func @transform_5(%arg0: i32) -> (i32, i32) {
    %c0_i32 = arith.constant 0 : i32
    %c0_i32_0 = arith.constant 0 : i32
    %c0_i32_1 = arith.constant 0 : i32
    return %c0_i32, %c0_i32_0 : i32, i32
  }
  func.func @transform_6(%arg0: i32) -> (i32, i32) {
    %c0_i32 = arith.constant 0 : i32
    %c0_i32_0 = arith.constant 0 : i32
    %c0_i32_1 = arith.constant 0 : i32
    return %c0_i32, %c0_i32_0 : i32, i32
  }
  func.func @transform_7(%arg0: i32) -> (i32, i32) {
    %c0_i32 = arith.constant 0 : i32
    %c0_i32_0 = arith.constant 0 : i32
    %c0_i32_1 = arith.constant 0 : i32
    return %c0_i32, %c0_i32_0 : i32, i32
  }
  func.func @transform_8(%arg0: i32) -> (i32, i32) {
    %c0_i32 = arith.constant 0 : i32
    %c0_i32_0 = arith.constant 0 : i32
    %c0_i32_1 = arith.constant 0 : i32
    return %c0_i32, %c0_i32_0 : i32, i32
  }
  func.func @transform_9(%arg0: i32) -> (i32, i32) {
    %c0_i32 = arith.constant 0 : i32
    %c0_i32_0 = arith.constant 0 : i32
    return %arg0, %c0_i32 : i32, i32
  }
}

</mosaic_0001>

<llo_original>
// kernel: tpu_custom_call.1
$region0: #{tpu_custom_call.1}
  #allocation0 [shape = 'u32[]', space=smem, size = 0x4, offset = 0x4, fixed_abs, tag = 'smem constant byte address 0x4 - core index']
  #allocation1 [shape = 'u32[144,128]{1,0:T(1,128)}', space=vmem, size = 0x12000, scoped, tag = 'internal scratch']
  %s0 = inlined_call_operand.hbm [shape: bf16[16,16], index: 0, kind: input, shape index: {}]
  %s1 = inlined_call_operand.hbm [shape: bf16[16,128], index: 1, kind: input, shape index: {}]
  %s2 = inlined_call_operand.vmem [shape: f32[1,128], index: 2, kind: input, shape index: {}]
  %s3 = inlined_call_operand.vmem [shape: bf16[128,128], index: 3, kind: input, shape index: {}]
  %s4 = inlined_call_operand.vmem [shape: f32[1,128], index: 4, kind: input, shape index: {}]
  %s5 = inlined_call_operand.hbm [shape: bf16[128,128], index: 5, kind: input, shape index: {}]
  %s6 = inlined_call_operand.vmem [shape: f32[1,128], index: 6, kind: input, shape index: {}]
  %s7 = inlined_call_operand.vmem [shape: bf16[128,4], index: 7, kind: input, shape index: {}]
  %s8 = inlined_call_operand.vmem [shape: f32[1,4], index: 8, kind: input, shape index: {}]
  %s9 = inlined_call_operand.vmem [shape: f32[16,4], index: 9, kind: output, shape index: {}]
  %s10 = sld [smem:[#allocation0]]
  $region81: #{tpu_custom_call.1} parent=0
    _
  %s12 = ssub.s32 1, %s10
  %s13 = scalar_select 0, %s12, %s10
  $region1: #{tpu_custom_call.1} parent=0
    #allocation2 [shape = 'u8[4096]{0}', space=vmem, size = 0x1000, scoped, tag = 'input window, operand 0']
    #allocation3 [shape = 's32[2]{0}', space=sflag, size = 0x8, scoped, tag = 'scoped memory for tpu_custom_call.1']
    #allocation4 [shape = 'u8[4096]{0}', space=vmem, size = 0x1000, scoped, tag = 'input window, operand 1, single buffered']
    #allocation5 [shape = 's32[1]{0}', space=sflag, size = 0x4, scoped, tag = 'scoped memory for tpu_custom_call.1']
    #allocation6 [shape = 'u8[32768]{0}', space=vmem, size = 0x8000, scoped, tag = 'input window, operand 5, single buffered']
    %14 = vsyncpa [#allocation3], 0
    %s15 = scalar_lea.sflag [#allocation3], 1
    %16 = vsyncpa %s15, 0
    %17 = vsyncpa [#allocation5], 0
    loop: start=0, step=1, limit=4
    $region2: #{tpu_custom_call.1} parent=1 // loop_pre_header
      _
    $region3: #{tpu_custom_call.1} parent=1 // loop_header
      %s19 = sphi 0, %s23
      %p20 = scmp.ge.s32.totalorder %s19, 4
      %s29 = sphi 0, %s31
      %s32 = sphi 0, %s29
      %s33 = sphi 0, %s32
      %s49 = sphi 0, %s33
      %s53 = sphi 0, %s53
      %s55 = sphi 0, %s53
      %s56 = sphi 0, %s55
      %s70 = sphi 0, %s56
      %s74 = sphi 0, %s74
      %s76 = sphi 0, %s74
      %s77 = sphi 0, %s76
      %s91 = sphi 0, %s77
      %s95 = sphi 0, %s95
      %s97 = sphi 0, %s95
      %s98 = sphi 0, %s97
      %s112 = sphi 0, %s98
      %s116 = sphi 0, %s116
      %s118 = sphi 0, %s116
      %s119 = sphi 0, %s118
      %s133 = sphi 0, %s119
      %s137 = sphi 0, %s137
      %s139 = sphi 0, %s137
      %s140 = sphi 0, %s139
      %s154 = sphi 0, %s140
      %s158 = sphi 0, %s158
      %s160 = sphi 0, %s158
      %s161 = sphi 0, %s160
      %s175 = sphi 0, %s161
      %s179 = sphi 0, %s179
      %s181 = sphi 0, %s179
      %s182 = sphi 0, %s181
      %s196 = sphi 0, %s182
      %s200 = sphi 0, %s200
      %s202 = sphi 0, %s200
      %s203 = sphi 0, %s202
      %s217 = sphi 0, %s203
      %s223 = sphi 0, %s225
      %s226 = sphi 0, %s223
      %s227 = sphi 0, %s226
      %s243 = sphi 0, %s227
    $region4: #{tpu_custom_call.1} parent=1 // loop_header_branch
      %22 = sbr.rel (%p20) target = $region8
    $region5: #{tpu_custom_call.1} parent=1 // loop_body
      %s24 = ssub.s32 %s19, 1
      %s25 = ssub.s32 %s19, 2
      %s26 = sadd.s32 %s19, 1
      %s27 = ssub.s32 %s19, %s26
      %p28 = scmp.eq.s32.totalorder %s27, 0
      %s30 = sadd.s32 %s29, 1
      %s31 = scalar_select %p28, %s29, %s30
      %p34 = pneg %p28
      %p35 = scmp.eq.s32.totalorder %s19, 1
      %p36 = por %p34, %p35
      %p37 = scmp.ne.s32.totalorder %s29, %s32
      %p38 = scmp.eq.s32.totalorder %s19, 0
      %p39 = por %p37, %p38
      %p40 = scmp.ne.s32.totalorder %s29, %s32
      %p41 = scmp.eq.s32.totalorder %s24, 1
      %p42 = por %p40, %p41
      %p43 = scmp.ne.s32.totalorder %s32, %s33
      %p44 = scmp.eq.s32.totalorder %s24, 0
      %p45 = por %p43, %p44
      %p46 = scmp.ne.s32.totalorder %s32, %s33
      %p47 = scmp.eq.s32.totalorder %s25, 1
      %p48 = por %p46, %p47
      %p50 = scmp.ne.s32.totalorder %s33, %s49
      %p51 = scmp.eq.s32.totalorder %s25, 0
      %p52 = por %p50, %p51
      %s54 = sadd.s32 %s53, 1
      %p57 = scmp.eq.s32.totalorder %s19, 1
      %p58 = scmp.ne.s32.totalorder %s53, %s55
      %p59 = scmp.eq.s32.totalorder %s19, 0
      %p60 = por %p58, %p59
      %p61 = scmp.ne.s32.totalorder %s53, %s55
      %p62 = scmp.eq.s32.totalorder %s24, 1
      %p63 = por %p61, %p62
      %p64 = scmp.ne.s32.totalorder %s55, %s56
      %p65 = scmp.eq.s32.totalorder %s24, 0
      %p66 = por %p64, %p65
      %p67 = scmp.ne.s32.totalorder %s55, %s56
      %p68 = scmp.eq.s32.totalorder %s25, 1
      %p69 = por %p67, %p68
      %p71 = scmp.ne.s32.totalorder %s56, %s70
      %p72 = scmp.eq.s32.totalorder %s25, 0
      %p73 = por %p71, %p72
      %s75 = sadd.s32 %s74, 1
      %p78 = scmp.eq.s32.totalorder %s19, 1
      %p79 = scmp.ne.s32.totalorder %s74, %s76
      %p80 = scmp.eq.s32.totalorder %s19, 0
      %p81 = por %p79, %p80
      %p82 = scmp.ne.s32.totalorder %s74, %s76
      %p83 = scmp.eq.s32.totalorder %s24, 1
      %p84 = por %p82, %p83
      %p85 = scmp.ne.s32.totalorder %s76, %s77
      %p86 = scmp.eq.s32.totalorder %s24, 0
      %p87 = por %p85, %p86
      %p88 = scmp.ne.s32.totalorder %s76, %s77
      %p89 = scmp.eq.s32.totalorder %s25, 1
      %p90 = por %p88, %p89
      %p92 = scmp.ne.s32.totalorder %s77, %s91
      %p93 = scmp.eq.s32.totalorder %s25, 0
      %p94 = por %p92, %p93
      %s96 = sadd.s32 %s95, 1
      %p99 = scmp.eq.s32.totalorder %s19, 1
      %p100 = scmp.ne.s32.totalorder %s95, %s97
      %p101 = scmp.eq.s32.totalorder %s19, 0
      %p102 = por %p100, %p101
      %p103 = scmp.ne.s32.totalorder %s95, %s97
      %p104 = scmp.eq.s32.totalorder %s24, 1
      %p105 = por %p103, %p104
      %p106 = scmp.ne.s32.totalorder %s97, %s98
      %p107 = scmp.eq.s32.totalorder %s24, 0
      %p108 = por %p106, %p107
      %p109 = scmp.ne.s32.totalorder %s97, %s98
      %p110 = scmp.eq.s32.totalorder %s25, 1
      %p111 = por %p109, %p110
      %p113 = scmp.ne.s32.totalorder %s98, %s112
      %p114 = scmp.eq.s32.totalorder %s25, 0
      %p115 = por %p113, %p114
      %s117 = sadd.s32 %s116, 1
      %p120 = scmp.eq.s32.totalorder %s19, 1
      %p121 = scmp.ne.s32.totalorder %s116, %s118
      %p122 = scmp.eq.s32.totalorder %s19, 0
      %p123 = por %p121, %p122
      %p124 = scmp.ne.s32.totalorder %s116, %s118
      %p125 = scmp.eq.s32.totalorder %s24, 1
      %p126 = por %p124, %p125
      %p127 = scmp.ne.s32.totalorder %s118, %s119
      %p128 = scmp.eq.s32.totalorder %s24, 0
      %p129 = por %p127, %p128
      %p130 = scmp.ne.s32.totalorder %s118, %s119
      %p131 = scmp.eq.s32.totalorder %s25, 1
      %p132 = por %p130, %p131
      %p134 = scmp.ne.s32.totalorder %s119, %s133
      %p135 = scmp.eq.s32.totalorder %s25, 0
      %p136 = por %p134, %p135
      %s138 = sadd.s32 %s137, 1
      %p141 = scmp.eq.s32.totalorder %s19, 1
      %p142 = scmp.ne.s32.totalorder %s137, %s139
      %p143 = scmp.eq.s32.totalorder %s19, 0
      %p144 = por %p142, %p143
      %p145 = scmp.ne.s32.totalorder %s137, %s139
      %p146 = scmp.eq.s32.totalorder %s24, 1
      %p147 = por %p145, %p146
      %p148 = scmp.ne.s32.totalorder %s139, %s140
      %p149 = scmp.eq.s32.totalorder %s24, 0
      %p150 = por %p148, %p149
      %p151 = scmp.ne.s32.totalorder %s139, %s140
      %p152 = scmp.eq.s32.totalorder %s25, 1
      %p153 = por %p151, %p152
      %p155 = scmp.ne.s32.totalorder %s140, %s154
      %p156 = scmp.eq.s32.totalorder %s25, 0
      %p157 = por %p155, %p156
      %s159 = sadd.s32 %s158, 1
      %p162 = scmp.eq.s32.totalorder %s19, 1
      %p163 = scmp.ne.s32.totalorder %s158, %s160
      %p164 = scmp.eq.s32.totalorder %s19, 0
      %p165 = por %p163, %p164
      %p166 = scmp.ne.s32.totalorder %s158, %s160
      %p167 = scmp.eq.s32.totalorder %s24, 1
      %p168 = por %p166, %p167
      %p169 = scmp.ne.s32.totalorder %s160, %s161
      %p170 = scmp.eq.s32.totalorder %s24, 0
      %p171 = por %p169, %p170
      %p172 = scmp.ne.s32.totalorder %s160, %s161
      %p173 = scmp.eq.s32.totalorder %s25, 1
      %p174 = por %p172, %p173
      %p176 = scmp.ne.s32.totalorder %s161, %s175
      %p177 = scmp.eq.s32.totalorder %s25, 0
      %p178 = por %p176, %p177
      %s180 = sadd.s32 %s179, 1
      %p183 = scmp.eq.s32.totalorder %s19, 1
      %p184 = scmp.ne.s32.totalorder %s179, %s181
      %p185 = scmp.eq.s32.totalorder %s19, 0
      %p186 = por %p184, %p185
      %p187 = scmp.ne.s32.totalorder %s179, %s181
      %p188 = scmp.eq.s32.totalorder %s24, 1
      %p189 = por %p187, %p188
      %p190 = scmp.ne.s32.totalorder %s181, %s182
      %p191 = scmp.eq.s32.totalorder %s24, 0
      %p192 = por %p190, %p191
      %p193 = scmp.ne.s32.totalorder %s181, %s182
      %p194 = scmp.eq.s32.totalorder %s25, 1
      %p195 = por %p193, %p194
      %p197 = scmp.ne.s32.totalorder %s182, %s196
      %p198 = scmp.eq.s32.totalorder %s25, 0
      %p199 = por %p197, %p198
      %s201 = sadd.s32 %s200, 1
      %p204 = scmp.eq.s32.totalorder %s19, 1
      %p205 = scmp.ne.s32.totalorder %s200, %s202
      %p206 = scmp.eq.s32.totalorder %s19, 0
      %p207 = por %p205, %p206
      %p208 = scmp.ne.s32.totalorder %s200, %s202
      %p209 = scmp.eq.s32.totalorder %s24, 1
      %p210 = por %p208, %p209
      %p211 = scmp.ne.s32.totalorder %s202, %s203
      %p212 = scmp.eq.s32.totalorder %s24, 0
      %p213 = por %p211, %p212
      %p214 = scmp.ne.s32.totalorder %s202, %s203
      %p215 = scmp.eq.s32.totalorder %s25, 1
      %p216 = por %p214, %p215
      %p218 = scmp.ne.s32.totalorder %s203, %s217
      %p219 = scmp.eq.s32.totalorder %s25, 0
      %p220 = por %p218, %p219
      %s221 = ssub.s32 %s19, %s26
      %p222 = scmp.eq.s32.totalorder %s221, 0
      %s224 = sadd.s32 %s223, 1
      %s225 = scalar_select %p222, %s223, %s224
      %p228 = pneg %p222
      %p229 = scmp.eq.s32.totalorder %s19, 1
      %p230 = por %p228, %p229
      %p231 = scmp.ne.s32.totalorder %s223, %s226
      %p232 = scmp.eq.s32.totalorder %s19, 0
      %p233 = por %p231, %p232
      %p234 = scmp.ne.s32.totalorder %s223, %s226
      %p235 = scmp.eq.s32.totalorder %s24, 1
      %p236 = por %p234, %p235
      %p237 = scmp.ne.s32.totalorder %s226, %s227
      %p238 = scmp.eq.s32.totalorder %s24, 0
      %p239 = por %p237, %p238
      %p240 = scmp.ne.s32.totalorder %s226, %s227
      %p241 = scmp.eq.s32.totalorder %s25, 1
      %p242 = por %p240, %p241
      %p244 = scmp.ne.s32.totalorder %s227, %s243
      %p245 = scmp.eq.s32.totalorder %s25, 0
      %p246 = por %p244, %p245
      %p247 = scmp.le.s32.totalorder 1, %s19
      %p248 = scmp.lt.s32.totalorder %s19, 3
      %p249 = pnand %p247, %p248
      %p250 = pneg %p249
      // Predicated region
      $region9: #{tpu_custom_call.1} parent=5 // pred_check
        _
      $region10: #{tpu_custom_call.1} parent=5 // pred_check_branch
        %252 = sbr.rel (%p249) target = $region12
      $region11: #{tpu_custom_call.1} parent=5 // pred_region
        %s253 = ssub.s32 %s19, 1
        // Predicated region
        $region13: #{tpu_custom_call.1} parent=11 // pred_check
          %p254 = pneg %p66
        $region14: #{tpu_custom_call.1} parent=11 // pred_check_branch
          %256 = sbr.rel (%p254) target = $region16
        $region15: #{tpu_custom_call.1} parent=11 // pred_region
          %s258 = ssub.s32 128, 128
          %259 = vsyncadd [#allocation5], %s258
          %s260 = sshll.u32 [#allocation4], 4
          %s261 = int_to_ptr.vmem [resolvable:$true] %s260
          %266 = dma.hbm_to_vmem [thread:$0]  %s1, 128, %s261, [#allocation5], 64, 64, 4
        $region16: #{tpu_custom_call.1} parent=11 // pred_fallthru
          _
        // Predicated region
        $region17: #{tpu_custom_call.1} parent=11 // pred_check
          %p267 = pneg %p87
        $region18: #{tpu_custom_call.1} parent=11 // pred_check_branch
          %269 = sbr.rel (%p267) target = $region20
        $region19: #{tpu_custom_call.1} parent=11 // pred_region
          _
        $region20: #{tpu_custom_call.1} parent=11 // pred_fallthru
          _
        // Predicated region
        $region21: #{tpu_custom_call.1} parent=11 // pred_check
          %p270 = pneg %p108
        $region22: #{tpu_custom_call.1} parent=11 // pred_check_branch
          %272 = sbr.rel (%p270) target = $region24
        $region23: #{tpu_custom_call.1} parent=11 // pred_region
          _
        $region24: #{tpu_custom_call.1} parent=11 // pred_fallthru
          _
        // Predicated region
        $region25: #{tpu_custom_call.1} parent=11 // pred_check
          %p273 = pneg %p129
        $region26: #{tpu_custom_call.1} parent=11 // pred_check_branch
          %275 = sbr.rel (%p273) target = $region28
        $region27: #{tpu_custom_call.1} parent=11 // pred_region
          _
        $region28: #{tpu_custom_call.1} parent=11 // pred_fallthru
          _
        // Predicated region
        $region29: #{tpu_custom_call.1} parent=11 // pred_check
          %p276 = pneg %p150
        $region30: #{tpu_custom_call.1} parent=11 // pred_check_branch
          %278 = sbr.rel (%p276) target = $region32
        $region31: #{tpu_custom_call.1} parent=11 // pred_region
          %s280 = ssub.s32 1024, 1024
          %281 = vsyncadd [#allocation5], %s280
          %s282 = sshll.u32 [#allocation6], 4
          %s283 = int_to_ptr.vmem [resolvable:$true] %s282
          %288 = dma.hbm_to_vmem [thread:$0]  %s5, 1024, %s283, [#allocation5], 64, 64, 4
        $region32: #{tpu_custom_call.1} parent=11 // pred_fallthru
          _
        // Predicated region
        $region33: #{tpu_custom_call.1} parent=11 // pred_check
          %p289 = pneg %p171
        $region34: #{tpu_custom_call.1} parent=11 // pred_check_branch
          %291 = sbr.rel (%p289) target = $region36
        $region35: #{tpu_custom_call.1} parent=11 // pred_region
          _
        $region36: #{tpu_custom_call.1} parent=11 // pred_fallthru
          _
        // Predicated region
        $region37: #{tpu_custom_call.1} parent=11 // pred_check
          %p292 = pneg %p192
        $region38: #{tpu_custom_call.1} parent=11 // pred_check_branch
          %294 = sbr.rel (%p292) target = $region40
        $region39: #{tpu_custom_call.1} parent=11 // pred_region
          _
        $region40: #{tpu_custom_call.1} parent=11 // pred_fallthru
          _
        // Predicated region
        $region41: #{tpu_custom_call.1} parent=11 // pred_check
          %p295 = pneg %p213
        $region42: #{tpu_custom_call.1} parent=11 // pred_check_branch
          %297 = sbr.rel (%p295) target = $region44
        $region43: #{tpu_custom_call.1} parent=11 // pred_region
          _
        $region44: #{tpu_custom_call.1} parent=11 // pred_fallthru
          _
      $region12: #{tpu_custom_call.1} parent=5 // pred_fallthru
        _
      %p298 = scmp.lt.s32.totalorder %s19, 2
      // Predicated region
      $region45: #{tpu_custom_call.1} parent=5 // pred_check
        %p299 = pneg %p298
      $region46: #{tpu_custom_call.1} parent=5 // pred_check_branch
        %301 = sbr.rel (%p299) target = $region48
      $region47: #{tpu_custom_call.1} parent=5 // pred_region
        // Predicated region
        $region49: #{tpu_custom_call.1} parent=47 // pred_check
          %p302 = pneg %p39
        $region50: #{tpu_custom_call.1} parent=47 // pred_check_branch
          %304 = sbr.rel (%p302) target = $region52
        $region51: #{tpu_custom_call.1} parent=47 // pred_region
          %s305 = sand.u32 %s29, 1
          %s306 = scalar_lea.sflag [#allocation3], %s305
          %s307 = sand.u32 %s29, 1
          %s308 = smul.addr %s307, 4
          %s309 = scalar_lea.vmem [#allocation2], %s308
          %s311 = ssub.s32 64, 64
          %312 = vsyncadd %s306, %s311
          %s313 = smul.addr %s19, 64
          %s314 = scalar_lea.hbm %s0, %s313
          %s316 = sshll.u32 %s309, 4
          %s317 = int_to_ptr.vmem [resolvable:$true] %s316
          %319 = dma.hbm_to_vmem [thread:$0]  %s314, 64, %s317, %s306
        $region52: #{tpu_custom_call.1} parent=47 // pred_fallthru
          _
      $region48: #{tpu_custom_call.1} parent=5 // pred_fallthru
        _
      %p320 = scmp.le.s32.totalorder 1, %s19
      %p321 = scmp.lt.s32.totalorder %s19, 3
      %p322 = pnand %p320, %p321
      %p323 = pneg %p322
      // Predicated region
      $region53: #{tpu_custom_call.1} parent=5 // pred_check
        _
      $region54: #{tpu_custom_call.1} parent=5 // pred_check_branch
        %325 = sbr.rel (%p322) target = $region56
      $region55: #{tpu_custom_call.1} parent=5 // pred_region
        %s326 = ssub.s32 %s19, 1
        %s327 = sand.u32 %s32, 1
        %s328 = scalar_lea.sflag [#allocation3], %s327
        %s329 = sand.u32 %s32, 1
        %s330 = smul.addr %s329, 4
        %s331 = scalar_lea.vmem [#allocation2], %s330
        // Predicated region
        $region57: #{tpu_custom_call.1} parent=55 // pred_check
          %p332 = pneg %p45
        $region58: #{tpu_custom_call.1} parent=55 // pred_check_branch
          %334 = sbr.rel (%p332) target = $region60
        $region59: #{tpu_custom_call.1} parent=55 // pred_region
          %335 = dma.done %s328, 64
        $region60: #{tpu_custom_call.1} parent=55 // pred_fallthru
          _
        // Predicated region
        $region61: #{tpu_custom_call.1} parent=55 // pred_check
          %p336 = pneg %p66
        $region62: #{tpu_custom_call.1} parent=55 // pred_check_branch
          %338 = sbr.rel (%p336) target = $region64
        $region63: #{tpu_custom_call.1} parent=55 // pred_region
          %339 = dma.done [#allocation5], 128
        $region64: #{tpu_custom_call.1} parent=55 // pred_fallthru
          _
        // Predicated region
        $region65: #{tpu_custom_call.1} parent=55 // pred_check
          %p340 = pneg %p150
        $region66: #{tpu_custom_call.1} parent=55 // pred_check_branch
          %342 = sbr.rel (%p340) target = $region68
        $region67: #{tpu_custom_call.1} parent=55 // pred_region
          %343 = dma.done [#allocation5], 1024
        $region68: #{tpu_custom_call.1} parent=55 // pred_fallthru
          _
        %s344 = sand.u32 %s32, 1
        %s345 = scalar_lea.sflag [#allocation3], %s344
        %s346 = sand.u32 %s32, 1
        %s347 = smul.addr %s346, 4
        %s348 = scalar_lea.vmem [#allocation2], %s347
        %p349 = pneg %p45
        %p350 = pneg %p42
        %p351 = pneg %p66
        %p352 = pneg %p63
        %p353 = pneg %p87
        %p354 = pneg %p84
        %p355 = pneg %p108
        %p356 = pneg %p105
        %p357 = pneg %p129
        %p358 = pneg %p126
        %p359 = pneg %p150
        %p360 = pneg %p147
        %p361 = pneg %p171
        %p362 = pneg %p168
        %p363 = pneg %p192
        %p364 = pneg %p189
        %p365 = pneg %p213
        %p366 = pneg %p210
        %p367 = pneg %p239
        %p368 = pneg %p236
        %p369 = scmp.lt.s32.totalorder %s24, 1
        %s370 = scalar_select %p369, %s24, 1
        %s371 = smul.addr %s370, 8
        %s372 = scalar_lea.vmem %s9, %s371
        %p373 = scmp.lt.s32.totalorder %s24, 1
        %s374 = scalar_select %p373, %s24, 1
        %s375 = smul.addr %s374, 8
        %s376 = scalar_lea.vmem %s9, %s375
        %v378 = vld [vmem:[%s331] sm:$0xf]
        %v379 = vld [vmem:[#allocation4] sm:$0xf]
        %v380 = vld [vmem:[#allocation4 + $0x4] sm:$0xf]
        %v381 = vld [vmem:[%s2] sm:$0x1]
        %v383 = vlaneseq
        %v384 = vshrl.u32 %v383, 7
        %v385 = vsub.s32 0, %v384
        %v386 = vrot.slane %v381, %v385
        %v390 = vunpack.c.l.b16 %v379
        %v391 = vunpack.c.l.b16 %v380
        %v392 = vpack.c.b16 %v391, %v390
        %vm394 = vcmask 130048
        %v396 = vsel %vm394, %v378, 0
        %398 = vmatprep.subr.bf16.mxu0 0
        %399 = vmatpush1.bf16.msra.mxu0 0
        %400 = vmatprep.subr.bf16.mxu0 0
        %401 = vmatpush1.bf16.msra.mxu0 0
        %402 = vmatprep.subr.bf16.mxu0 0
        %403 = vmatpush1.bf16.msra.mxu0 0
        %404 = vmatprep.subr.bf16.mxu0 0
        %405 = vmatpush1.bf16.msra.mxu0 0
        %406 = vmatprep.subr.bf16.mxu0 0
        %407 = vmatpush1.bf16.msra.mxu0 0
        %408 = vmatprep.subr.bf16.mxu0 0
        %409 = vmatpush1.bf16.msra.mxu0 0
        %410 = vmatprep.subr.bf16.mxu0 0
        %411 = vmatpush1.bf16.msra.mxu0 0
        %412 = vmatprep.subr.bf16.mxu0 0
        %413 = vmatpush1.bf16.msra.mxu0 %v392
        %414 = vmatprep.subr.bf16.mxu0 0
        %415 = vmatpush2.bf16.msra.mxu0 0
        %416 = vmatprep.subr.bf16.mxu0 0
        %417 = vmatpush2.bf16.msra.mxu0 0
        %418 = vmatprep.subr.bf16.mxu0 0
        %419 = vmatpush2.bf16.msra.mxu0 0
        %420 = vmatprep.subr.bf16.mxu0 0
        %421 = vmatpush2.bf16.msra.mxu0 0
        %422 = vmatprep.subr.bf16.mxu0 0
        %423 = vmatpush2.bf16.msra.mxu0 0
        %424 = vmatprep.subr.bf16.mxu0 0
        %425 = vmatpush2.bf16.msra.mxu0 0
        %426 = vmatprep.subr.bf16.mxu0 0
        %427 = vmatpush2.bf16.msra.mxu0 0
        %428 = vmatprep.subr.bf16.mxu0 0
        %429 = vmatpush2.bf16.msra.mxu0 0
        %430 = vmatprep.mubr.bf16.mxu0 0
        %431 = vmatmul.mubr.bf16.gmra.mxu0 %v396
        %v432 = vpop.f32.mrf.mxu0
        %v433 = vadd.f32 %v386, %v432
        %v434 = vpop.f32.mrf.mxu0
        %v435 = vpop.f32.mrf.mxu0
        %v436 = vpop.f32.mrf.mxu0
        %437 = vdwg.mxu0
        %v438 = vmax.f32 %v433, 0.0
        %v439 = vpack.c.bf16 %v438, %v438
        %v440 = vld [vmem:[%s3] sm:$0xf]
        %v441 = vld [vmem:[%s3 + $0x4] sm:$0xf]
        %v442 = vld [vmem:[%s3 + $0x8] sm:$0xf]
        %v443 = vld [vmem:[%s3 + $0xc] sm:$0xf]
        %v444 = vld [vmem:[%s3 + $0x10] sm:$0xf]
        %v445 = vld [vmem:[%s3 + $0x14] sm:$0xf]
        %v446 = vld [vmem:[%s3 + $0x18] sm:$0xf]
        %v447 = vld [vmem:[%s3 + $0x1c] sm:$0xf]
        %v448 = vld [vmem:[%s3 + $0x20] sm:$0xf]
        %v449 = vld [vmem:[%s3 + $0x24] sm:$0xf]
        %v450 = vld [vmem:[%s3 + $0x28] sm:$0xf]
        %v451 = vld [vmem:[%s3 + $0x2c] sm:$0xf]
        %v452 = vld [vmem:[%s3 + $0x30] sm:$0xf]
        %v453 = vld [vmem:[%s3 + $0x34] sm:$0xf]
        %v454 = vld [vmem:[%s3 + $0x38] sm:$0xf]
        %v455 = vld [vmem:[%s3 + $0x3c] sm:$0xf]
        %v456 = vld [vmem:[%s4] sm:$0x1]
        %v458 = vlaneseq
        %v459 = vshrl.u32 %v458, 7
        %v460 = vsub.s32 0, %v459
        %v461 = vrot.slane %v456, %v460
        %v479 = vunpack.c.l.b16 %v440
        %v480 = vunpack.c.l.b16 %v441
        %v481 = vunpack.c.l.b16 %v442
        %v482 = vunpack.c.l.b16 %v443
        %v483 = vunpack.c.l.b16 %v444
        %v484 = vunpack.c.l.b16 %v445
        %v485 = vunpack.c.l.b16 %v446
        %v486 = vunpack.c.l.b16 %v447
        %v487 = vunpack.c.l.b16 %v448
        %v488 = vunpack.c.l.b16 %v449
        %v489 = vunpack.c.l.b16 %v450
        %v490 = vunpack.c.l.b16 %v451
        %v491 = vunpack.c.l.b16 %v452
        %v492 = vunpack.c.l.b16 %v453
        %v493 = vunpack.c.l.b16 %v454
        %v494 = vunpack.c.l.b16 %v455
        %v495 = vpack.c.b16 %v480, %v479
        %v496 = vpack.c.b16 %v482, %v481
        %v497 = vpack.c.b16 %v484, %v483
        %v498 = vpack.c.b16 %v486, %v485
        %v499 = vpack.c.b16 %v488, %v487
        %v500 = vpack.c.b16 %v490, %v489
        %v501 = vpack.c.b16 %v492, %v491
        %v502 = vpack.c.b16 %v494, %v493
        %511 = vmatprep.subr.bf16.mxu0 0
        %512 = vmatpush1.bf16.msra.mxu0 %v502
        %513 = vmatprep.subr.bf16.mxu0 0
        %514 = vmatpush1.bf16.msra.mxu0 %v501
        %515 = vmatprep.subr.bf16.mxu0 0
        %516 = vmatpush1.bf16.msra.mxu0 %v500
        %517 = vmatprep.subr.bf16.mxu0 0
        %518 = vmatpush1.bf16.msra.mxu0 %v499
        %519 = vmatprep.subr.bf16.mxu0 0
        %520 = vmatpush1.bf16.msra.mxu0 %v498
        %521 = vmatprep.subr.bf16.mxu0 0
        %522 = vmatpush1.bf16.msra.mxu0 %v497
        %523 = vmatprep.subr.bf16.mxu0 0
        %524 = vmatpush1.bf16.msra.mxu0 %v496
        %525 = vmatprep.subr.bf16.mxu0 0
        %526 = vmatpush1.bf16.msra.mxu0 %v495
        %527 = vmatprep.subr.bf16.mxu0 0
        %528 = vmatpush2.bf16.msra.mxu0 0
        %529 = vmatprep.subr.bf16.mxu0 0
        %530 = vmatpush2.bf16.msra.mxu0 0
        %531 = vmatprep.subr.bf16.mxu0 0
        %532 = vmatpush2.bf16.msra.mxu0 0
        %533 = vmatprep.subr.bf16.mxu0 0
        %534 = vmatpush2.bf16.msra.mxu0 0
        %535 = vmatprep.subr.bf16.mxu0 0
        %536 = vmatpush2.bf16.msra.mxu0 0
        %537 = vmatprep.subr.bf16.mxu0 0
        %538 = vmatpush2.bf16.msra.mxu0 0
        %539 = vmatprep.subr.bf16.mxu0 0
        %540 = vmatpush2.bf16.msra.mxu0 0
        %541 = vmatprep.subr.bf16.mxu0 0
        %542 = vmatpush2.bf16.msra.mxu0 0
        %543 = vmatprep.mubr.bf16.mxu0 0
        %544 = vmatmul.mubr.bf16.gmra.mxu0 %v439
        %v545 = vpop.f32.mrf.mxu0
        %v546 = vadd.f32 %v461, %v545
        %v547 = vpop.f32.mrf.mxu0
        %v548 = vpop.f32.mrf.mxu0
        %v549 = vpop.f32.mrf.mxu0
        %550 = vdwg.mxu0
        %v551 = vmax.f32 %v546, 0.0
        %v552 = vpack.c.bf16 %v551, %v551
        %v553 = vld [vmem:[#allocation6] sm:$0xf]
        %v554 = vld [vmem:[#allocation6 + $0x4] sm:$0xf]
        %v555 = vld [vmem:[#allocation6 + $0x8] sm:$0xf]
        %v556 = vld [vmem:[#allocation6 + $0xc] sm:$0xf]
        %v557 = vld [vmem:[#allocation6 + $0x10] sm:$0xf]
        %v558 = vld [vmem:[#allocation6 + $0x14] sm:$0xf]
        %v559 = vld [vmem:[#allocation6 + $0x18] sm:$0xf]
        %v560 = vld [vmem:[#allocation6 + $0x1c] sm:$0xf]
        %v561 = vld [vmem:[#allocation6 + $0x20] sm:$0xf]
        %v562 = vld [vmem:[#allocation6 + $0x24] sm:$0xf]
        %v563 = vld [vmem:[#allocation6 + $0x28] sm:$0xf]
        %v564 = vld [vmem:[#allocation6 + $0x2c] sm:$0xf]
        %v565 = vld [vmem:[#allocation6 + $0x30] sm:$0xf]
        %v566 = vld [vmem:[#allocation6 + $0x34] sm:$0xf]
        %v567 = vld [vmem:[#allocation6 + $0x38] sm:$0xf]
        %v568 = vld [vmem:[#allocation6 + $0x3c] sm:$0xf]
        %v569 = vld [vmem:[%s6] sm:$0x1]
        %v571 = vlaneseq
        %v572 = vshrl.u32 %v571, 7
        %v573 = vsub.s32 0, %v572
        %v574 = vrot.slane %v569, %v573
        %v592 = vunpack.c.l.b16 %v553
        %v593 = vunpack.c.l.b16 %v554
        %v594 = vunpack.c.l.b16 %v555
        %v595 = vunpack.c.l.b16 %v556
        %v596 = vunpack.c.l.b16 %v557
        %v597 = vunpack.c.l.b16 %v558
        %v598 = vunpack.c.l.b16 %v559
        %v599 = vunpack.c.l.b16 %v560
        %v600 = vunpack.c.l.b16 %v561
        %v601 = vunpack.c.l.b16 %v562
        %v602 = vunpack.c.l.b16 %v563
        %v603 = vunpack.c.l.b16 %v564
        %v604 = vunpack.c.l.b16 %v565
        %v605 = vunpack.c.l.b16 %v566
        %v606 = vunpack.c.l.b16 %v567
        %v607 = vunpack.c.l.b16 %v568
        %v608 = vpack.c.b16 %v593, %v592
        %v609 = vpack.c.b16 %v595, %v594
        %v610 = vpack.c.b16 %v597, %v596
        %v611 = vpack.c.b16 %v599, %v598
        %v612 = vpack.c.b16 %v601, %v600
        %v613 = vpack.c.b16 %v603, %v602
        %v614 = vpack.c.b16 %v605, %v604
        %v615 = vpack.c.b16 %v607, %v606
        %624 = vmatprep.subr.bf16.mxu0 0
        %625 = vmatpush1.bf16.msra.mxu0 %v615
        %626 = vmatprep.subr.bf16.mxu0 0
        %627 = vmatpush1.bf16.msra.mxu0 %v614
        %628 = vmatprep.subr.bf16.mxu0 0
        %629 = vmatpush1.bf16.msra.mxu0 %v613
        %630 = vmatprep.subr.bf16.mxu0 0
        %631 = vmatpush1.bf16.msra.mxu0 %v612
        %632 = vmatprep.subr.bf16.mxu0 0
        %633 = vmatpush1.bf16.msra.mxu0 %v611
        %634 = vmatprep.subr.bf16.mxu0 0
        %635 = vmatpush1.bf16.msra.mxu0 %v610
        %636 = vmatprep.subr.bf16.mxu0 0
        %637 = vmatpush1.bf16.msra.mxu0 %v609
        %638 = vmatprep.subr.bf16.mxu0 0
        %639 = vmatpush1.bf16.msra.mxu0 %v608
        %640 = vmatprep.subr.bf16.mxu0 0
        %641 = vmatpush2.bf16.msra.mxu0 0
        %642 = vmatprep.subr.bf16.mxu0 0
        %643 = vmatpush2.bf16.msra.mxu0 0
        %644 = vmatprep.subr.bf16.mxu0 0
        %645 = vmatpush2.bf16.msra.mxu0 0
        %646 = vmatprep.subr.bf16.mxu0 0
        %647 = vmatpush2.bf16.msra.mxu0 0
        %648 = vmatprep.subr.bf16.mxu0 0
        %649 = vmatpush2.bf16.msra.mxu0 0
        %650 = vmatprep.subr.bf16.mxu0 0
        %651 = vmatpush2.bf16.msra.mxu0 0
        %652 = vmatprep.subr.bf16.mxu0 0
        %653 = vmatpush2.bf16.msra.mxu0 0
        %654 = vmatprep.subr.bf16.mxu0 0
        %655 = vmatpush2.bf16.msra.mxu0 0
        %656 = vmatprep.mubr.bf16.mxu0 0
        %657 = vmatmul.mubr.bf16.gmra.mxu0 %v552
        %v658 = vpop.f32.mrf.mxu0
        %v659 = vadd.f32 %v574, %v658
        %v660 = vpop.f32.mrf.mxu0
        %v661 = vpop.f32.mrf.mxu0
        %v662 = vpop.f32.mrf.mxu0
        %663 = vdwg.mxu0
        %v664 = vmax.f32 %v659, 0.0
        %v665 = vpack.c.bf16 %v664, %v664
        %v666 = vld [vmem:[%s7] sm:$0xf]
        %v667 = vld [vmem:[%s7 + $0x4] sm:$0xf]
        %v668 = vld [vmem:[%s7 + $0x8] sm:$0xf]
        %v669 = vld [vmem:[%s7 + $0xc] sm:$0xf]
        %v670 = vld [vmem:[%s7 + $0x10] sm:$0xf]
        %v671 = vld [vmem:[%s7 + $0x14] sm:$0xf]
        %v672 = vld [vmem:[%s7 + $0x18] sm:$0xf]
        %v673 = vld [vmem:[%s7 + $0x1c] sm:$0xf]
        %v674 = vld [vmem:[%s7 + $0x20] sm:$0xf]
        %v675 = vld [vmem:[%s7 + $0x24] sm:$0xf]
        %v676 = vld [vmem:[%s7 + $0x28] sm:$0xf]
        %v677 = vld [vmem:[%s7 + $0x2c] sm:$0xf]
        %v678 = vld [vmem:[%s7 + $0x30] sm:$0xf]
        %v679 = vld [vmem:[%s7 + $0x34] sm:$0xf]
        %v680 = vld [vmem:[%s7 + $0x38] sm:$0xf]
        %v681 = vld [vmem:[%s7 + $0x3c] sm:$0xf]
        %v682 = vld [vmem:[%s8] sm:$0x1]
        %v684 = vlaneseq
        %v685 = vshrl.u32 %v684, 7
        %v686 = vsub.s32 0, %v685
        %v687 = vrot.slane %v682, %v686
        %v705 = vunpack.c.l.b16 %v666
        %v706 = vunpack.c.l.b16 %v667
        %v707 = vunpack.c.l.b16 %v668
        %v708 = vunpack.c.l.b16 %v669
        %v709 = vunpack.c.l.b16 %v670
        %v710 = vunpack.c.l.b16 %v671
        %v711 = vunpack.c.l.b16 %v672
        %v712 = vunpack.c.l.b16 %v673
        %v713 = vunpack.c.l.b16 %v674
        %v714 = vunpack.c.l.b16 %v675
        %v715 = vunpack.c.l.b16 %v676
        %v716 = vunpack.c.l.b16 %v677
        %v717 = vunpack.c.l.b16 %v678
        %v718 = vunpack.c.l.b16 %v679
        %v719 = vunpack.c.l.b16 %v680
        %v720 = vunpack.c.l.b16 %v681
        %v721 = vpack.c.b16 %v706, %v705
        %v722 = vpack.c.b16 %v708, %v707
        %v723 = vpack.c.b16 %v710, %v709
        %v724 = vpack.c.b16 %v712, %v711
        %v725 = vpack.c.b16 %v714, %v713
        %v726 = vpack.c.b16 %v716, %v715
        %v727 = vpack.c.b16 %v718, %v717
        %v728 = vpack.c.b16 %v720, %v719
        %737 = vmatprep.subr.bf16.mxu0 0
        %738 = vmatpush1.bf16.msra.mxu0 %v728
        %739 = vmatprep.subr.bf16.mxu0 0
        %740 = vmatpush1.bf16.msra.mxu0 %v727
        %741 = vmatprep.subr.bf16.mxu0 0
        %742 = vmatpush1.bf16.msra.mxu0 %v726
        %743 = vmatprep.subr.bf16.mxu0 0
        %744 = vmatpush1.bf16.msra.mxu0 %v725
        %745 = vmatprep.subr.bf16.mxu0 0
        %746 = vmatpush1.bf16.msra.mxu0 %v724
        %747 = vmatprep.subr.bf16.mxu0 0
        %748 = vmatpush1.bf16.msra.mxu0 %v723
        %749 = vmatprep.subr.bf16.mxu0 0
        %750 = vmatpush1.bf16.msra.mxu0 %v722
        %751 = vmatprep.subr.bf16.mxu0 0
        %752 = vmatpush1.bf16.msra.mxu0 %v721
        %753 = vmatprep.subr.bf16.mxu0 0
        %754 = vmatpush2.bf16.msra.mxu0 0
        %755 = vmatprep.subr.bf16.mxu0 0
        %756 = vmatpush2.bf16.msra.mxu0 0
        %757 = vmatprep.subr.bf16.mxu0 0
        %758 = vmatpush2.bf16.msra.mxu0 0
        %759 = vmatprep.subr.bf16.mxu0 0
        %760 = vmatpush2.bf16.msra.mxu0 0
        %761 = vmatprep.subr.bf16.mxu0 0
        %762 = vmatpush2.bf16.msra.mxu0 0
        %763 = vmatprep.subr.bf16.mxu0 0
        %764 = vmatpush2.bf16.msra.mxu0 0
        %765 = vmatprep.subr.bf16.mxu0 0
        %766 = vmatpush2.bf16.msra.mxu0 0
        %767 = vmatprep.subr.bf16.mxu0 0
        %768 = vmatpush2.bf16.msra.mxu0 0
        %769 = vmatprep.mubr.bf16.mxu0 0
        %770 = vmatmul.mubr.bf16.gmra.mxu0 %v665
        %v771 = vpop.f32.mrf.mxu0
        %v772 = vadd.f32 %v687, %v771
        %v773 = vpop.f32.mrf.mxu0
        %v774 = vpop.f32.mrf.mxu0
        %v775 = vpop.f32.mrf.mxu0
        %776 = vdwg.mxu0
        %vm777 = vcmask 31744
        %778 = vst.msk [vmem:[%s376] sm:$0xff] %vm777, %v772
        %p779 = scmp.lt.s32.totalorder %s24, 1
        %s780 = scalar_select %p779, %s24, 1
        %s781 = smul.addr %s780, 8
        %s782 = scalar_lea.vmem %s9, %s781
        // Predicated region
        $region69: #{tpu_custom_call.1} parent=55 // pred_check
          %p783 = pneg %p236
        $region70: #{tpu_custom_call.1} parent=55 // pred_check_branch
          %785 = sbr.rel (%p783) target = $region72
        $region71: #{tpu_custom_call.1} parent=55 // pred_region
          _
        $region72: #{tpu_custom_call.1} parent=55 // pred_fallthru
          _
      $region56: #{tpu_custom_call.1} parent=5 // pred_fallthru
        _
      %p786 = scmp.le.s32.totalorder 2, %s19
      // Predicated region
      $region73: #{tpu_custom_call.1} parent=5 // pred_check
        %p787 = pneg %p786
      $region74: #{tpu_custom_call.1} parent=5 // pred_check_branch
        %789 = sbr.rel (%p787) target = $region76
      $region75: #{tpu_custom_call.1} parent=5 // pred_region
        %s790 = ssub.s32 %s19, 2
        // Predicated region
        $region77: #{tpu_custom_call.1} parent=75 // pred_check
          %p791 = pneg %p242
        $region78: #{tpu_custom_call.1} parent=75 // pred_check_branch
          %793 = sbr.rel (%p791) target = $region80
        $region79: #{tpu_custom_call.1} parent=75 // pred_region
          %p794 = scmp.lt.s32.totalorder %s25, 1
          %s795 = scalar_select %p794, %s25, 1
          %s796 = smul.addr %s795, 8
          %s797 = scalar_lea.vmem %s9, %s796
        $region80: #{tpu_custom_call.1} parent=75 // pred_fallthru
          _
      $region76: #{tpu_custom_call.1} parent=5 // pred_fallthru
        _
    $region6: #{tpu_custom_call.1} parent=1 // loop_footer
      %s23 = sadd.s32 1, %s19
    $region7: #{tpu_custom_call.1} parent=1 // loop_footer_branch
      %18 = sbr.rel target = $region3
    $region8: #{tpu_custom_call.1} parent=1 // loop_exit
      _
    %798 = vsyncpa [#allocation3], 1
    %s799 = scalar_lea.sflag [#allocation3], 1
    %800 = vsyncpa %s799, 1
    %801 = vsyncpa [#allocation5], 1

// kernel: tpu_custom_call.1
$region0: #{tpu_custom_call.1}
  #allocation0 [shape = 'u32[]', space=smem, size = 0x4, offset = 0x4, fixed_abs, tag = 'smem constant byte address 0x4 - core index']
  #allocation1 [shape = 'u32[144,128]{1,0:T(1,128)}', space=vmem, size = 0x12000, scoped, tag = 'internal scratch']
  %s0 = inlined_call_operand.hbm [shape: bf16[16,16], index: 0, kind: input, shape index: {}]
  %s1 = inlined_call_operand.hbm [shape: bf16[16,128], index: 1, kind: input, shape index: {}]
  %s2 = inlined_call_operand.vmem [shape: f32[1,128], index: 2, kind: input, shape index: {}]
  %s3 = inlined_call_operand.vmem [shape: bf16[128,128], index: 3, kind: input, shape index: {}]
  %s4 = inlined_call_operand.vmem [shape: f32[1,128], index: 4, kind: input, shape index: {}]
  %s5 = inlined_call_operand.hbm [shape: bf16[128,128], index: 5, kind: input, shape index: {}]
  %s6 = inlined_call_operand.vmem [shape: f32[1,128], index: 6, kind: input, shape index: {}]
  %s7 = inlined_call_operand.vmem [shape: bf16[128,4], index: 7, kind: input, shape index: {}]
  %s8 = inlined_call_operand.vmem [shape: f32[1,4], index: 8, kind: input, shape index: {}]
  %s9 = inlined_call_operand.vmem [shape: f32[16,4], index: 9, kind: output, shape index: {}]
  %s10 = sld [smem:[#allocation0]]
  $region81: #{tpu_custom_call.1} parent=0
    _
  %s12 = ssub.s32 1, %s10
  %s13 = scalar_select 0, %s12, %s10
  $region1: #{tpu_custom_call.1} parent=0
    #allocation2 [shape = 'u8[4096]{0}', space=vmem, size = 0x1000, scoped, tag = 'input window, operand 0']
    #allocation3 [shape = 's32[2]{0}', space=sflag, size = 0x8, scoped, tag = 'scoped memory for tpu_custom_call.1']
    #allocation4 [shape = 'u8[4096]{0}', space=vmem, size = 0x1000, scoped, tag = 'input window, operand 1, single buffered']
    #allocation5 [shape = 's32[1]{0}', space=sflag, size = 0x4, scoped, tag = 'scoped memory for tpu_custom_call.1']
    #allocation6 [shape = 'u8[32768]{0}', space=vmem, size = 0x8000, scoped, tag = 'input window, operand 5, single buffered']
    %14 = vsyncpa [#allocation3], 0
    %s15 = scalar_lea.sflag [#allocation3], 1
    %16 = vsyncpa %s15, 0
    %17 = vsyncpa [#allocation5], 0
    loop: start=0, step=1, limit=4
    $region2: #{tpu_custom_call.1} parent=1 // loop_pre_header
      _
    $region3: #{tpu_custom_call.1} parent=1 // loop_header
      %s19 = sphi 0, %s23
      %p20 = scmp.ge.s32.totalorder %s19, 4
      %s29 = sphi 0, %s31
      %s32 = sphi 0, %s29
      %s33 = sphi 0, %s32
      %s49 = sphi 0, %s33
      %s53 = sphi 0, %s53
      %s55 = sphi 0, %s53
      %s56 = sphi 0, %s55
      %s70 = sphi 0, %s56
      %s74 = sphi 0, %s74
      %s76 = sphi 0, %s74
      %s77 = sphi 0, %s76
      %s91 = sphi 0, %s77
      %s95 = sphi 0, %s95
      %s97 = sphi 0, %s95
      %s98 = sphi 0, %s97
      %s112 = sphi 0, %s98
      %s116 = sphi 0, %s116
      %s118 = sphi 0, %s116
      %s119 = sphi 0, %s118
      %s133 = sphi 0, %s119
      %s137 = sphi 0, %s137
      %s139 = sphi 0, %s137
      %s140 = sphi 0, %s139
      %s154 = sphi 0, %s140
      %s158 = sphi 0, %s158
      %s160 = sphi 0, %s158
      %s161 = sphi 0, %s160
      %s175 = sphi 0, %s161
      %s179 = sphi 0, %s179
      %s181 = sphi 0, %s179
      %s182 = sphi 0, %s181
      %s196 = sphi 0, %s182
      %s200 = sphi 0, %s200
      %s202 = sphi 0, %s200
      %s203 = sphi 0, %s202
      %s217 = sphi 0, %s203
      %s223 = sphi 0, %s225
      %s226 = sphi 0, %s223
      %s227 = sphi 0, %s226
      %s243 = sphi 0, %s227
    $region4: #{tpu_custom_call.1} parent=1 // loop_header_branch
      %22 = sbr.rel (%p20) target = $region8
    $region5: #{tpu_custom_call.1} parent=1 // loop_body
      %s24 = ssub.s32 %s19, 1
      %s25 = ssub.s32 %s19, 2
      %s26 = sadd.s32 %s19, 1
      %s27 = ssub.s32 %s19, %s26
      %p28 = scmp.eq.s32.totalorder %s27, 0
      %s30 = sadd.s32 %s29, 1
      %s31 = scalar_select %p28, %s29, %s30
      %p34 = pneg %p28
      %p35 = scmp.eq.s32.totalorder %s19, 1
      %p36 = por %p34, %p35
      %p37 = scmp.ne.s32.totalorder %s29, %s32
      %p38 = scmp.eq.s32.totalorder %s19, 0
      %p39 = por %p37, %p38
      %p40 = scmp.ne.s32.totalorder %s29, %s32
      %p41 = scmp.eq.s32.totalorder %s24, 1
      %p42 = por %p40, %p41
      %p43 = scmp.ne.s32.totalorder %s32, %s33
      %p44 = scmp.eq.s32.totalorder %s24, 0
      %p45 = por %p43, %p44
      %p46 = scmp.ne.s32.totalorder %s32, %s33
      %p47 = scmp.eq.s32.totalorder %s25, 1
      %p48 = por %p46, %p47
      %p50 = scmp.ne.s32.totalorder %s33, %s49
      %p51 = scmp.eq.s32.totalorder %s25, 0
      %p52 = por %p50, %p51
      %s54 = sadd.s32 %s53, 1
      %p57 = scmp.eq.s32.totalorder %s19, 1
      %p58 = scmp.ne.s32.totalorder %s53, %s55
      %p59 = scmp.eq.s32.totalorder %s19, 0
      %p60 = por %p58, %p59
      %p61 = scmp.ne.s32.totalorder %s53, %s55
      %p62 = scmp.eq.s32.totalorder %s24, 1
      %p63 = por %p61, %p62
      %p64 = scmp.ne.s32.totalorder %s55, %s56
      %p65 = scmp.eq.s32.totalorder %s24, 0
      %p66 = por %p64, %p65
      %p67 = scmp.ne.s32.totalorder %s55, %s56
      %p68 = scmp.eq.s32.totalorder %s25, 1
      %p69 = por %p67, %p68
      %p71 = scmp.ne.s32.totalorder %s56, %s70
      %p72 = scmp.eq.s32.totalorder %s25, 0
      %p73 = por %p71, %p72
      %s75 = sadd.s32 %s74, 1
      %p78 = scmp.eq.s32.totalorder %s19, 1
      %p79 = scmp.ne.s32.totalorder %s74, %s76
      %p80 = scmp.eq.s32.totalorder %s19, 0
      %p81 = por %p79, %p80
      %p82 = scmp.ne.s32.totalorder %s74, %s76
      %p83 = scmp.eq.s32.totalorder %s24, 1
      %p84 = por %p82, %p83
      %p85 = scmp.ne.s32.totalorder %s76, %s77
      %p86 = scmp.eq.s32.totalorder %s24, 0
      %p87 = por %p85, %p86
      %p88 = scmp.ne.s32.totalorder %s76, %s77
      %p89 = scmp.eq.s32.totalorder %s25, 1
      %p90 = por %p88, %p89
      %p92 = scmp.ne.s32.totalorder %s77, %s91
      %p93 = scmp.eq.s32.totalorder %s25, 0
      %p94 = por %p92, %p93
      %s96 = sadd.s32 %s95, 1
      %p99 = scmp.eq.s32.totalorder %s19, 1
      %p100 = scmp.ne.s32.totalorder %s95, %s97
      %p101 = scmp.eq.s32.totalorder %s19, 0
      %p102 = por %p100, %p101
      %p103 = scmp.ne.s32.totalorder %s95, %s97
      %p104 = scmp.eq.s32.totalorder %s24, 1
      %p105 = por %p103, %p104
      %p106 = scmp.ne.s32.totalorder %s97, %s98
      %p107 = scmp.eq.s32.totalorder %s24, 0
      %p108 = por %p106, %p107
      %p109 = scmp.ne.s32.totalorder %s97, %s98
      %p110 = scmp.eq.s32.totalorder %s25, 1
      %p111 = por %p109, %p110
      %p113 = scmp.ne.s32.totalorder %s98, %s112
      %p114 = scmp.eq.s32.totalorder %s25, 0
      %p115 = por %p113, %p114
      %s117 = sadd.s32 %s116, 1
      %p120 = scmp.eq.s32.totalorder %s19, 1
      %p121 = scmp.ne.s32.totalorder %s116, %s118
      %p122 = scmp.eq.s32.totalorder %s19, 0
      %p123 = por %p121, %p122
      %p124 = scmp.ne.s32.totalorder %s116, %s118
      %p125 = scmp.eq.s32.totalorder %s24, 1
      %p126 = por %p124, %p125
      %p127 = scmp.ne.s32.totalorder %s118, %s119
      %p128 = scmp.eq.s32.totalorder %s24, 0
      %p129 = por %p127, %p128
      %p130 = scmp.ne.s32.totalorder %s118, %s119
      %p131 = scmp.eq.s32.totalorder %s25, 1
      %p132 = por %p130, %p131
      %p134 = scmp.ne.s32.totalorder %s119, %s133
      %p135 = scmp.eq.s32.totalorder %s25, 0
      %p136 = por %p134, %p135
      %s138 = sadd.s32 %s137, 1
      %p141 = scmp.eq.s32.totalorder %s19, 1
      %p142 = scmp.ne.s32.totalorder %s137, %s139
      %p143 = scmp.eq.s32.totalorder %s19, 0
      %p144 = por %p142, %p143
      %p145 = scmp.ne.s32.totalorder %s137, %s139
      %p146 = scmp.eq.s32.totalorder %s24, 1
      %p147 = por %p145, %p146
      %p148 = scmp.ne.s32.totalorder %s139, %s140
      %p149 = scmp.eq.s32.totalorder %s24, 0
      %p150 = por %p148, %p149
      %p151 = scmp.ne.s32.totalorder %s139, %s140
      %p152 = scmp.eq.s32.totalorder %s25, 1
      %p153 = por %p151, %p152
      %p155 = scmp.ne.s32.totalorder %s140, %s154
      %p156 = scmp.eq.s32.totalorder %s25, 0
      %p157 = por %p155, %p156
      %s159 = sadd.s32 %s158, 1
      %p162 = scmp.eq.s32.totalorder %s19, 1
      %p163 = scmp.ne.s32.totalorder %s158, %s160
      %p164 = scmp.eq.s32.totalorder %s19, 0
      %p165 = por %p163, %p164
      %p166 = scmp.ne.s32.totalorder %s158, %s160
      %p167 = scmp.eq.s32.totalorder %s24, 1
      %p168 = por %p166, %p167
      %p169 = scmp.ne.s32.totalorder %s160, %s161
      %p170 = scmp.eq.s32.totalorder %s24, 0
      %p171 = por %p169, %p170
      %p172 = scmp.ne.s32.totalorder %s160, %s161
      %p173 = scmp.eq.s32.totalorder %s25, 1
      %p174 = por %p172, %p173
      %p176 = scmp.ne.s32.totalorder %s161, %s175
      %p177 = scmp.eq.s32.totalorder %s25, 0
      %p178 = por %p176, %p177
      %s180 = sadd.s32 %s179, 1
      %p183 = scmp.eq.s32.totalorder %s19, 1
      %p184 = scmp.ne.s32.totalorder %s179, %s181
      %p185 = scmp.eq.s32.totalorder %s19, 0
      %p186 = por %p184, %p185
      %p187 = scmp.ne.s32.totalorder %s179, %s181
      %p188 = scmp.eq.s32.totalorder %s24, 1
      %p189 = por %p187, %p188
      %p190 = scmp.ne.s32.totalorder %s181, %s182
      %p191 = scmp.eq.s32.totalorder %s24, 0
      %p192 = por %p190, %p191
      %p193 = scmp.ne.s32.totalorder %s181, %s182
      %p194 = scmp.eq.s32.totalorder %s25, 1
      %p195 = por %p193, %p194
      %p197 = scmp.ne.s32.totalorder %s182, %s196
      %p198 = scmp.eq.s32.totalorder %s25, 0
      %p199 = por %p197, %p198
      %s201 = sadd.s32 %s200, 1
      %p204 = scmp.eq.s32.totalorder %s19, 1
      %p205 = scmp.ne.s32.totalorder %s200, %s202
      %p206 = scmp.eq.s32.totalorder %s19, 0
      %p207 = por %p205, %p206
      %p208 = scmp.ne.s32.totalorder %s200, %s202
      %p209 = scmp.eq.s32.totalorder %s24, 1
      %p210 = por %p208, %p209
      %p211 = scmp.ne.s32.totalorder %s202, %s203
      %p212 = scmp.eq.s32.totalorder %s24, 0
      %p213 = por %p211, %p212
      %p214 = scmp.ne.s32.totalorder %s202, %s203
      %p215 = scmp.eq.s32.totalorder %s25, 1
      %p216 = por %p214, %p215
      %p218 = scmp.ne.s32.totalorder %s203, %s217
      %p219 = scmp.eq.s32.totalorder %s25, 0
      %p220 = por %p218, %p219
      %s221 = ssub.s32 %s19, %s26
      %p222 = scmp.eq.s32.totalorder %s221, 0
      %s224 = sadd.s32 %s223, 1
      %s225 = scalar_select %p222, %s223, %s224
      %p228 = pneg %p222
      %p229 = scmp.eq.s32.totalorder %s19, 1
      %p230 = por %p228, %p229
      %p231 = scmp.ne.s32.totalorder %s223, %s226
      %p232 = scmp.eq.s32.totalorder %s19, 0
      %p233 = por %p231, %p232
      %p234 = scmp.ne.s32.totalorder %s223, %s226
      %p235 = scmp.eq.s32.totalorder %s24, 1
      %p236 = por %p234, %p235
      %p237 = scmp.ne.s32.totalorder %s226, %s227
      %p238 = scmp.eq.s32.totalorder %s24, 0
      %p239 = por %p237, %p238
      %p240 = scmp.ne.s32.totalorder %s226, %s227
      %p241 = scmp.eq.s32.totalorder %s25, 1
      %p242 = por %p240, %p241
      %p244 = scmp.ne.s32.totalorder %s227, %s243
      %p245 = scmp.eq.s32.totalorder %s25, 0
      %p246 = por %p244, %p245
      %p247 = scmp.le.s32.totalorder 1, %s19
      %p248 = scmp.lt.s32.totalorder %s19, 3
      %p249 = pnand %p247, %p248
      %p250 = pneg %p249
      // Predicated region
      $region9: #{tpu_custom_call.1} parent=5 // pred_check
        _
      $region10: #{tpu_custom_call.1} parent=5 // pred_check_branch
        %252 = sbr.rel (%p249) target = $region12
      $region11: #{tpu_custom_call.1} parent=5 // pred_region
        %s253 = ssub.s32 %s19, 1
        // Predicated region
        $region13: #{tpu_custom_call.1} parent=11 // pred_check
          %p254 = pneg %p66
        $region14: #{tpu_custom_call.1} parent=11 // pred_check_branch
          %256 = sbr.rel (%p254) target = $region16
        $region15: #{tpu_custom_call.1} parent=11 // pred_region
          %s258 = ssub.s32 128, 128
          %259 = vsyncadd [#allocation5], %s258
          %s260 = sshll.u32 [#allocation4], 4
          %s261 = int_to_ptr.vmem [resolvable:$true] %s260
          %266 = dma.hbm_to_vmem [thread:$0]  %s1, 128, %s261, [#allocation5], 64, 64, 4
        $region16: #{tpu_custom_call.1} parent=11 // pred_fallthru
          _
        // Predicated region
        $region17: #{tpu_custom_call.1} parent=11 // pred_check
          %p267 = pneg %p87
        $region18: #{tpu_custom_call.1} parent=11 // pred_check_branch
          %269 = sbr.rel (%p267) target = $region20
        $region19: #{tpu_custom_call.1} parent=11 // pred_region
          _
        $region20: #{tpu_custom_call.1} parent=11 // pred_fallthru
          _
        // Predicated region
        $region21: #{tpu_custom_call.1} parent=11 // pred_check
          %p270 = pneg %p108
        $region22: #{tpu_custom_call.1} parent=11 // pred_check_branch
          %272 = sbr.rel (%p270) target = $region24
        $region23: #{tpu_custom_call.1} parent=11 // pred_region
          _
        $region24: #{tpu_custom_call.1} parent=11 // pred_fallthru
          _
        // Predicated region
        $region25: #{tpu_custom_call.1} parent=11 // pred_check
          %p273 = pneg %p129
        $region26: #{tpu_custom_call.1} parent=11 // pred_check_branch
          %275 = sbr.rel (%p273) target = $region28
        $region27: #{tpu_custom_call.1} parent=11 // pred_region
          _
        $region28: #{tpu_custom_call.1} parent=11 // pred_fallthru
          _
        // Predicated region
        $region29: #{tpu_custom_call.1} parent=11 // pred_check
          %p276 = pneg %p150
        $region30: #{tpu_custom_call.1} parent=11 // pred_check_branch
          %278 = sbr.rel (%p276) target = $region32
        $region31: #{tpu_custom_call.1} parent=11 // pred_region
          %s280 = ssub.s32 1024, 1024
          %281 = vsyncadd [#allocation5], %s280
          %s282 = sshll.u32 [#allocation6], 4
          %s283 = int_to_ptr.vmem [resolvable:$true] %s282
          %288 = dma.hbm_to_vmem [thread:$0]  %s5, 1024, %s283, [#allocation5], 64, 64, 4
        $region32: #{tpu_custom_call.1} parent=11 // pred_fallthru
          _
        // Predicated region
        $region33: #{tpu_custom_call.1} parent=11 // pred_check
          %p289 = pneg %p171
        $region34: #{tpu_custom_call.1} parent=11 // pred_check_branch
          %291 = sbr.rel (%p289) target = $region36
        $region35: #{tpu_custom_call.1} parent=11 // pred_region
          _
        $region36: #{tpu_custom_call.1} parent=11 // pred_fallthru
          _
        // Predicated region
        $region37: #{tpu_custom_call.1} parent=11 // pred_check
          %p292 = pneg %p192
        $region38: #{tpu_custom_call.1} parent=11 // pred_check_branch
          %294 = sbr.rel (%p292) target = $region40
        $region39: #{tpu_custom_call.1} parent=11 // pred_region
          _
        $region40: #{tpu_custom_call.1} parent=11 // pred_fallthru
          _
        // Predicated region
        $region41: #{tpu_custom_call.1} parent=11 // pred_check
          %p295 = pneg %p213
        $region42: #{tpu_custom_call.1} parent=11 // pred_check_branch
          %297 = sbr.rel (%p295) target = $region44
        $region43: #{tpu_custom_call.1} parent=11 // pred_region
          _
        $region44: #{tpu_custom_call.1} parent=11 // pred_fallthru
          _
      $region12: #{tpu_custom_call.1} parent=5 // pred_fallthru
        _
      %p298 = scmp.lt.s32.totalorder %s19, 2
      // Predicated region
      $region45: #{tpu_custom_call.1} parent=5 // pred_check
        %p299 = pneg %p298
      $region46: #{tpu_custom_call.1} parent=5 // pred_check_branch
        %301 = sbr.rel (%p299) target = $region48
      $region47: #{tpu_custom_call.1} parent=5 // pred_region
        // Predicated region
        $region49: #{tpu_custom_call.1} parent=47 // pred_check
          %p302 = pneg %p39
        $region50: #{tpu_custom_call.1} parent=47 // pred_check_branch
          %304 = sbr.rel (%p302) target = $region52
        $region51: #{tpu_custom_call.1} parent=47 // pred_region
          %s305 = sand.u32 %s29, 1
          %s306 = scalar_lea.sflag [#allocation3], %s305
          %s307 = sand.u32 %s29, 1
          %s308 = smul.addr %s307, 4
          %s309 = scalar_lea.vmem [#allocation2], %s308
          %s311 = ssub.s32 64, 64
          %312 = vsyncadd %s306, %s311
          %s313 = smul.addr %s19, 64
          %s314 = scalar_lea.hbm %s0, %s313
          %s316 = sshll.u32 %s309, 4
          %s317 = int_to_ptr.vmem [resolvable:$true] %s316
          %319 = dma.hbm_to_vmem [thread:$0]  %s314, 64, %s317, %s306
        $region52: #{tpu_custom_call.1} parent=47 // pred_fallthru
          _
      $region48: #{tpu_custom_call.1} parent=5 // pred_fallthru
        _
      %p320 = scmp.le.s32.totalorder 1, %s19
      %p321 = scmp.lt.s32.totalorder %s19, 3
      %p322 = pnand %p320, %p321
      %p323 = pneg %p322
      // Predicated region
      $region53: #{tpu_custom_call.1} parent=5 // pred_check
        _
      $region54: #{tpu_custom_call.1} parent=5 // pred_check_branch
        %325 = sbr.rel (%p322) target = $region56
      $region55: #{tpu_custom_call.1} parent=5 // pred_region
        %s326 = ssub.s32 %s19, 1
        %s327 = sand.u32 %s32, 1
        %s328 = scalar_lea.sflag [#allocation3], %s327
        %s329 = sand.u32 %s32, 1
        %s330 = smul.addr %s329, 4
        %s331 = scalar_lea.vmem [#allocation2], %s330
        // Predicated region
        $region57: #{tpu_custom_call.1} parent=55 // pred_check
          %p332 = pneg %p45
        $region58: #{tpu_custom_call.1} parent=55 // pred_check_branch
          %334 = sbr.rel (%p332) target = $region60
        $region59: #{tpu_custom_call.1} parent=55 // pred_region
          %335 = dma.done %s328, 64
        $region60: #{tpu_custom_call.1} parent=55 // pred_fallthru
          _
        // Predicated region
        $region61: #{tpu_custom_call.1} parent=55 // pred_check
          %p336 = pneg %p66
        $region62: #{tpu_custom_call.1} parent=55 // pred_check_branch
          %338 = sbr.rel (%p336) target = $region64
        $region63: #{tpu_custom_call.1} parent=55 // pred_region
          %339 = dma.done [#allocation5], 128
        $region64: #{tpu_custom_call.1} parent=55 // pred_fallthru
          _
        // Predicated region
        $region65: #{tpu_custom_call.1} parent=55 // pred_check
          %p340 = pneg %p150
        $region66: #{tpu_custom_call.1} parent=55 // pred_check_branch
          %342 = sbr.rel (%p340) target = $region68
        $region67: #{tpu_custom_call.1} parent=55 // pred_region
          %343 = dma.done [#allocation5], 1024
        $region68: #{tpu_custom_call.1} parent=55 // pred_fallthru
          _
        %s344 = sand.u32 %s32, 1
        %s345 = scalar_lea.sflag [#allocation3], %s344
        %s346 = sand.u32 %s32, 1
        %s347 = smul.addr %s346, 4
        %s348 = scalar_lea.vmem [#allocation2], %s347
        %p349 = pneg %p45
        %p350 = pneg %p42
        %p351 = pneg %p66
        %p352 = pneg %p63
        %p353 = pneg %p87
        %p354 = pneg %p84
        %p355 = pneg %p108
        %p356 = pneg %p105
        %p357 = pneg %p129
        %p358 = pneg %p126
        %p359 = pneg %p150
        %p360 = pneg %p147
        %p361 = pneg %p171
        %p362 = pneg %p168
        %p363 = pneg %p192
        %p364 = pneg %p189
        %p365 = pneg %p213
        %p366 = pneg %p210
        %p367 = pneg %p239
        %p368 = pneg %p236
        %p369 = scmp.lt.s32.totalorder %s24, 1
        %s370 = scalar_select %p369, %s24, 1
        %s371 = smul.addr %s370, 8
        %s372 = scalar_lea.vmem %s9, %s371
        %p373 = scmp.lt.s32.totalorder %s24, 1
        %s374 = scalar_select %p373, %s24, 1
        %s375 = smul.addr %s374, 8
        %s376 = scalar_lea.vmem %s9, %s375
        %v378 = vld [vmem:[%s331] sm:$0xf]
        %v379 = vld [vmem:[#allocation4] sm:$0xf]
        %v380 = vld [vmem:[#allocation4 + $0x4] sm:$0xf]
        %v381 = vld [vmem:[%s2] sm:$0x1]
        %v383 = vlaneseq
        %v384 = vshrl.u32 %v383, 7
        %v385 = vsub.s32 0, %v384
        %v386 = vrot.slane %v381, %v385
        %v390 = vunpack.c.l.b16 %v379
        %v391 = vunpack.c.l.b16 %v380
        %v392 = vpack.c.b16 %v391, %v390
        %vm394 = vcmask 130048
        %v396 = vsel %vm394, %v378, 0
        %398 = vmatprep.subr.bf16.mxu0 0
        %399 = vmatpush1.bf16.msra.mxu0 0
        %400 = vmatprep.subr.bf16.mxu0 0
        %401 = vmatpush1.bf16.msra.mxu0 0
        %402 = vmatprep.subr.bf16.mxu0 0
        %403 = vmatpush1.bf16.msra.mxu0 0
        %404 = vmatprep.subr.bf16.mxu0 0
        %405 = vmatpush1.bf16.msra.mxu0 0
        %406 = vmatprep.subr.bf16.mxu0 0
        %407 = vmatpush1.bf16.msra.mxu0 0
        %408 = vmatprep.subr.bf16.mxu0 0
        %409 = vmatpush1.bf16.msra.mxu0 0
        %410 = vmatprep.subr.bf16.mxu0 0
        %411 = vmatpush1.bf16.msra.mxu0 0
        %412 = vmatprep.subr.bf16.mxu0 0
        %413 = vmatpush1.bf16.msra.mxu0 %v392
        %414 = vmatprep.subr.bf16.mxu0 0
        %415 = vmatpush2.bf16.msra.mxu0 0
        %416 = vmatprep.subr.bf16.mxu0 0
        %417 = vmatpush2.bf16.msra.mxu0 0
        %418 = vmatprep.subr.bf16.mxu0 0
        %419 = vmatpush2.bf16.msra.mxu0 0
        %420 = vmatprep.subr.bf16.mxu0 0
        %421 = vmatpush2.bf16.msra.mxu0 0
        %422 = vmatprep.subr.bf16.mxu0 0
        %423 = vmatpush2.bf16.msra.mxu0 0
        %424 = vmatprep.subr.bf16.mxu0 0
        %425 = vmatpush2.bf16.msra.mxu0 0
        %426 = vmatprep.subr.bf16.mxu0 0
        %427 = vmatpush2.bf16.msra.mxu0 0
        %428 = vmatprep.subr.bf16.mxu0 0
        %429 = vmatpush2.bf16.msra.mxu0 0
        %430 = vmatprep.mubr.bf16.mxu0 0
        %431 = vmatmul.mubr.bf16.gmra.mxu0 %v396
        %v432 = vpop.f32.mrf.mxu0
        %v433 = vadd.f32 %v386, %v432
        %v434 = vpop.f32.mrf.mxu0
        %v435 = vpop.f32.mrf.mxu0
        %v436 = vpop.f32.mrf.mxu0
        %437 = vdwg.mxu0
        %v438 = vmax.f32 %v433, 0.0
        %v439 = vpack.c.bf16 %v438, %v438
        %v440 = vld [vmem:[%s3] sm:$0xf]
        %v441 = vld [vmem:[%s3 + $0x4] sm:$0xf]
        %v442 = vld [vmem:[%s3 + $0x8] sm:$0xf]
        %v443 = vld [vmem:[%s3 + $0xc] sm:$0xf]
        %v444 = vld [vmem:[%s3 + $0x10] sm:$0xf]
        %v445 = vld [vmem:[%s3 + $0x14] sm:$0xf]
        %v446 = vld [vmem:[%s3 + $0x18] sm:$0xf]
        %v447 = vld [vmem:[%s3 + $0x1c] sm:$0xf]
        %v448 = vld [vmem:[%s3 + $0x20] sm:$0xf]
        %v449 = vld [vmem:[%s3 + $0x24] sm:$0xf]
        %v450 = vld [vmem:[%s3 + $0x28] sm:$0xf]
        %v451 = vld [vmem:[%s3 + $0x2c] sm:$0xf]
        %v452 = vld [vmem:[%s3 + $0x30] sm:$0xf]
        %v453 = vld [vmem:[%s3 + $0x34] sm:$0xf]
        %v454 = vld [vmem:[%s3 + $0x38] sm:$0xf]
        %v455 = vld [vmem:[%s3 + $0x3c] sm:$0xf]
        %v456 = vld [vmem:[%s4] sm:$0x1]
        %v458 = vlaneseq
        %v459 = vshrl.u32 %v458, 7
        %v460 = vsub.s32 0, %v459
        %v461 = vrot.slane %v456, %v460
        %v479 = vunpack.c.l.b16 %v440
        %v480 = vunpack.c.l.b16 %v441
        %v481 = vunpack.c.l.b16 %v442
        %v482 = vunpack.c.l.b16 %v443
        %v483 = vunpack.c.l.b16 %v444
        %v484 = vunpack.c.l.b16 %v445
        %v485 = vunpack.c.l.b16 %v446
        %v486 = vunpack.c.l.b16 %v447
        %v487 = vunpack.c.l.b16 %v448
        %v488 = vunpack.c.l.b16 %v449
        %v489 = vunpack.c.l.b16 %v450
        %v490 = vunpack.c.l.b16 %v451
        %v491 = vunpack.c.l.b16 %v452
        %v492 = vunpack.c.l.b16 %v453
        %v493 = vunpack.c.l.b16 %v454
        %v494 = vunpack.c.l.b16 %v455
        %v495 = vpack.c.b16 %v480, %v479
        %v496 = vpack.c.b16 %v482, %v481
        %v497 = vpack.c.b16 %v484, %v483
        %v498 = vpack.c.b16 %v486, %v485
        %v499 = vpack.c.b16 %v488, %v487
        %v500 = vpack.c.b16 %v490, %v489
        %v501 = vpack.c.b16 %v492, %v491
        %v502 = vpack.c.b16 %v494, %v493
        %511 = vmatprep.subr.bf16.mxu0 0
        %512 = vmatpush1.bf16.msra.mxu0 %v502
        %513 = vmatprep.subr.bf16.mxu0 0
        %514 = vmatpush1.bf16.msra.mxu0 %v501
        %515 = vmatprep.subr.bf16.mxu0 0
        %516 = vmatpush1.bf16.msra.mxu0 %v500
        %517 = vmatprep.subr.bf16.mxu0 0
        %518 = vmatpush1.bf16.msra.mxu0 %v499
        %519 = vmatprep.subr.bf16.mxu0 0
        %520 = vmatpush1.bf16.msra.mxu0 %v498
        %521 = vmatprep.subr.bf16.mxu0 0
        %522 = vmatpush1.bf16.msra.mxu0 %v497
        %523 = vmatprep.subr.bf16.mxu0 0
        %524 = vmatpush1.bf16.msra.mxu0 %v496
        %525 = vmatprep.subr.bf16.mxu0 0
        %526 = vmatpush1.bf16.msra.mxu0 %v495
        %527 = vmatprep.subr.bf16.mxu0 0
        %528 = vmatpush2.bf16.msra.mxu0 0
        %529 = vmatprep.subr.bf16.mxu0 0
        %530 = vmatpush2.bf16.msra.mxu0 0
        %531 = vmatprep.subr.bf16.mxu0 0
        %532 = vmatpush2.bf16.msra.mxu0 0
        %533 = vmatprep.subr.bf16.mxu0 0
        %534 = vmatpush2.bf16.msra.mxu0 0
        %535 = vmatprep.subr.bf16.mxu0 0
        %536 = vmatpush2.bf16.msra.mxu0 0
        %537 = vmatprep.subr.bf16.mxu0 0
        %538 = vmatpush2.bf16.msra.mxu0 0
        %539 = vmatprep.subr.bf16.mxu0 0
        %540 = vmatpush2.bf16.msra.mxu0 0
        %541 = vmatprep.subr.bf16.mxu0 0
        %542 = vmatpush2.bf16.msra.mxu0 0
        %543 = vmatprep.mubr.bf16.mxu0 0
        %544 = vmatmul.mubr.bf16.gmra.mxu0 %v439
        %v545 = vpop.f32.mrf.mxu0
        %v546 = vadd.f32 %v461, %v545
        %v547 = vpop.f32.mrf.mxu0
        %v548 = vpop.f32.mrf.mxu0
        %v549 = vpop.f32.mrf.mxu0
        %550 = vdwg.mxu0
        %v551 = vmax.f32 %v546, 0.0
        %v552 = vpack.c.bf16 %v551, %v551
        %v553 = vld [vmem:[#allocation6] sm:$0xf]
        %v554 = vld [vmem:[#allocation6 + $0x4] sm:$0xf]
        %v555 = vld [vmem:[#allocation6 + $0x8] sm:$0xf]
        %v556 = vld [vmem:[#allocation6 + $0xc] sm:$0xf]
        %v557 = vld [vmem:[#allocation6 + $0x10] sm:$0xf]
        %v558 = vld [vmem:[#allocation6 + $0x14] sm:$0xf]
        %v559 = vld [vmem:[#allocation6 + $0x18] sm:$0xf]
        %v560 = vld [vmem:[#allocation6 + $0x1c] sm:$0xf]
        %v561 = vld [vmem:[#allocation6 + $0x20] sm:$0xf]
        %v562 = vld [vmem:[#allocation6 + $0x24] sm:$0xf]
        %v563 = vld [vmem:[#allocation6 + $0x28] sm:$0xf]
        %v564 = vld [vmem:[#allocation6 + $0x2c] sm:$0xf]
        %v565 = vld [vmem:[#allocation6 + $0x30] sm:$0xf]
        %v566 = vld [vmem:[#allocation6 + $0x34] sm:$0xf]
        %v567 = vld [vmem:[#allocation6 + $0x38] sm:$0xf]
        %v568 = vld [vmem:[#allocation6 + $0x3c] sm:$0xf]
        %v569 = vld [vmem:[%s6] sm:$0x1]
        %v571 = vlaneseq
        %v572 = vshrl.u32 %v571, 7
        %v573 = vsub.s32 0, %v572
        %v574 = vrot.slane %v569, %v573
        %v592 = vunpack.c.l.b16 %v553
        %v593 = vunpack.c.l.b16 %v554
        %v594 = vunpack.c.l.b16 %v555
        %v595 = vunpack.c.l.b16 %v556
        %v596 = vunpack.c.l.b16 %v557
        %v597 = vunpack.c.l.b16 %v558
        %v598 = vunpack.c.l.b16 %v559
        %v599 = vunpack.c.l.b16 %v560
        %v600 = vunpack.c.l.b16 %v561
        %v601 = vunpack.c.l.b16 %v562
        %v602 = vunpack.c.l.b16 %v563
        %v603 = vunpack.c.l.b16 %v564
        %v604 = vunpack.c.l.b16 %v565
        %v605 = vunpack.c.l.b16 %v566
        %v606 = vunpack.c.l.b16 %v567
        %v607 = vunpack.c.l.b16 %v568
        %v608 = vpack.c.b16 %v593, %v592
        %v609 = vpack.c.b16 %v595, %v594
        %v610 = vpack.c.b16 %v597, %v596
        %v611 = vpack.c.b16 %v599, %v598
        %v612 = vpack.c.b16 %v601, %v600
        %v613 = vpack.c.b16 %v603, %v602
        %v614 = vpack.c.b16 %v605, %v604
        %v615 = vpack.c.b16 %v607, %v606
        %624 = vmatprep.subr.bf16.mxu0 0
        %625 = vmatpush1.bf16.msra.mxu0 %v615
        %626 = vmatprep.subr.bf16.mxu0 0
        %627 = vmatpush1.bf16.msra.mxu0 %v614
        %628 = vmatprep.subr.bf16.mxu0 0
        %629 = vmatpush1.bf16.msra.mxu0 %v613
        %630 = vmatprep.subr.bf16.mxu0 0
        %631 = vmatpush1.bf16.msra.mxu0 %v612
        %632 = vmatprep.subr.bf16.mxu0 0
        %633 = vmatpush1.bf16.msra.mxu0 %v611
        %634 = vmatprep.subr.bf16.mxu0 0
        %635 = vmatpush1.bf16.msra.mxu0 %v610
        %636 = vmatprep.subr.bf16.mxu0 0
        %637 = vmatpush1.bf16.msra.mxu0 %v609
        %638 = vmatprep.subr.bf16.mxu0 0
        %639 = vmatpush1.bf16.msra.mxu0 %v608
        %640 = vmatprep.subr.bf16.mxu0 0
        %641 = vmatpush2.bf16.msra.mxu0 0
        %642 = vmatprep.subr.bf16.mxu0 0
        %643 = vmatpush2.bf16.msra.mxu0 0
        %644 = vmatprep.subr.bf16.mxu0 0
        %645 = vmatpush2.bf16.msra.mxu0 0
        %646 = vmatprep.subr.bf16.mxu0 0
        %647 = vmatpush2.bf16.msra.mxu0 0
        %648 = vmatprep.subr.bf16.mxu0 0
        %649 = vmatpush2.bf16.msra.mxu0 0
        %650 = vmatprep.subr.bf16.mxu0 0
        %651 = vmatpush2.bf16.msra.mxu0 0
        %652 = vmatprep.subr.bf16.mxu0 0
        %653 = vmatpush2.bf16.msra.mxu0 0
        %654 = vmatprep.subr.bf16.mxu0 0
        %655 = vmatpush2.bf16.msra.mxu0 0
        %656 = vmatprep.mubr.bf16.mxu0 0
        %657 = vmatmul.mubr.bf16.gmra.mxu0 %v552
        %v658 = vpop.f32.mrf.mxu0
        %v659 = vadd.f32 %v574, %v658
        %v660 = vpop.f32.mrf.mxu0
        %v661 = vpop.f32.mrf.mxu0
        %v662 = vpop.f32.mrf.mxu0
        %663 = vdwg.mxu0
        %v664 = vmax.f32 %v659, 0.0
        %v665 = vpack.c.bf16 %v664, %v664
        %v666 = vld [vmem:[%s7] sm:$0xf]
        %v667 = vld [vmem:[%s7 + $0x4] sm:$0xf]
        %v668 = vld [vmem:[%s7 + $0x8] sm:$0xf]
        %v669 = vld [vmem:[%s7 + $0xc] sm:$0xf]
        %v670 = vld [vmem:[%s7 + $0x10] sm:$0xf]
        %v671 = vld [vmem:[%s7 + $0x14] sm:$0xf]
        %v672 = vld [vmem:[%s7 + $0x18] sm:$0xf]
        %v673 = vld [vmem:[%s7 + $0x1c] sm:$0xf]
        %v674 = vld [vmem:[%s7 + $0x20] sm:$0xf]
        %v675 = vld [vmem:[%s7 + $0x24] sm:$0xf]
        %v676 = vld [vmem:[%s7 + $0x28] sm:$0xf]
        %v677 = vld [vmem:[%s7 + $0x2c] sm:$0xf]
        %v678 = vld [vmem:[%s7 + $0x30] sm:$0xf]
        %v679 = vld [vmem:[%s7 + $0x34] sm:$0xf]
        %v680 = vld [vmem:[%s7 + $0x38] sm:$0xf]
        %v681 = vld [vmem:[%s7 + $0x3c] sm:$0xf]
        %v682 = vld [vmem:[%s8] sm:$0x1]
        %v684 = vlaneseq
        %v685 = vshrl.u32 %v684, 7
        %v686 = vsub.s32 0, %v685
        %v687 = vrot.slane %v682, %v686
        %v705 = vunpack.c.l.b16 %v666
        %v706 = vunpack.c.l.b16 %v667
        %v707 = vunpack.c.l.b16 %v668
        %v708 = vunpack.c.l.b16 %v669
        %v709 = vunpack.c.l.b16 %v670
        %v710 = vunpack.c.l.b16 %v671
        %v711 = vunpack.c.l.b16 %v672
        %v712 = vunpack.c.l.b16 %v673
        %v713 = vunpack.c.l.b16 %v674
        %v714 = vunpack.c.l.b16 %v675
        %v715 = vunpack.c.l.b16 %v676
        %v716 = vunpack.c.l.b16 %v677
        %v717 = vunpack.c.l.b16 %v678
        %v718 = vunpack.c.l.b16 %v679
        %v719 = vunpack.c.l.b16 %v680
        %v720 = vunpack.c.l.b16 %v681
        %v721 = vpack.c.b16 %v706, %v705
        %v722 = vpack.c.b16 %v708, %v707
        %v723 = vpack.c.b16 %v710, %v709
        %v724 = vpack.c.b16 %v712, %v711
        %v725 = vpack.c.b16 %v714, %v713
        %v726 = vpack.c.b16 %v716, %v715
        %v727 = vpack.c.b16 %v718, %v717
        %v728 = vpack.c.b16 %v720, %v719
        %737 = vmatprep.subr.bf16.mxu0 0
        %738 = vmatpush1.bf16.msra.mxu0 %v728
        %739 = vmatprep.subr.bf16.mxu0 0
        %740 = vmatpush1.bf16.msra.mxu0 %v727
        %741 = vmatprep.subr.bf16.mxu0 0
        %742 = vmatpush1.bf16.msra.mxu0 %v726
        %743 = vmatprep.subr.bf16.mxu0 0
        %744 = vmatpush1.bf16.msra.mxu0 %v725
        %745 = vmatprep.subr.bf16.mxu0 0
        %746 = vmatpush1.bf16.msra.mxu0 %v724
        %747 = vmatprep.subr.bf16.mxu0 0
        %748 = vmatpush1.bf16.msra.mxu0 %v723
        %749 = vmatprep.subr.bf16.mxu0 0
        %750 = vmatpush1.bf16.msra.mxu0 %v722
        %751 = vmatprep.subr.bf16.mxu0 0
        %752 = vmatpush1.bf16.msra.mxu0 %v721
        %753 = vmatprep.subr.bf16.mxu0 0
        %754 = vmatpush2.bf16.msra.mxu0 0
        %755 = vmatprep.subr.bf16.mxu0 0
        %756 = vmatpush2.bf16.msra.mxu0 0
        %757 = vmatprep.subr.bf16.mxu0 0
        %758 = vmatpush2.bf16.msra.mxu0 0
        %759 = vmatprep.subr.bf16.mxu0 0
        %760 = vmatpush2.bf16.msra.mxu0 0
        %761 = vmatprep.subr.bf16.mxu0 0
        %762 = vmatpush2.bf16.msra.mxu0 0
        %763 = vmatprep.subr.bf16.mxu0 0
        %764 = vmatpush2.bf16.msra.mxu0 0
        %765 = vmatprep.subr.bf16.mxu0 0
        %766 = vmatpush2.bf16.msra.mxu0 0
        %767 = vmatprep.subr.bf16.mxu0 0
        %768 = vmatpush2.bf16.msra.mxu0 0
        %769 = vmatprep.mubr.bf16.mxu0 0
        %770 = vmatmul.mubr.bf16.gmra.mxu0 %v665
        %v771 = vpop.f32.mrf.mxu0
        %v772 = vadd.f32 %v687, %v771
        %v773 = vpop.f32.mrf.mxu0
        %v774 = vpop.f32.mrf.mxu0
        %v775 = vpop.f32.mrf.mxu0
        %776 = vdwg.mxu0
        %vm777 = vcmask 31744
        %778 = vst.msk [vmem:[%s376] sm:$0xff] %vm777, %v772
        %p779 = scmp.lt.s32.totalorder %s24, 1
        %s780 = scalar_select %p779, %s24, 1
        %s781 = smul.addr %s780, 8
        %s782 = scalar_lea.vmem %s9, %s781
        // Predicated region
        $region69: #{tpu_custom_call.1} parent=55 // pred_check
          %p783 = pneg %p236
        $region70: #{tpu_custom_call.1} parent=55 // pred_check_branch
          %785 = sbr.rel (%p783) target = $region72
        $region71: #{tpu_custom_call.1} parent=55 // pred_region
          _
        $region72: #{tpu_custom_call.1} parent=55 // pred_fallthru
          _
      $region56: #{tpu_custom_call.1} parent=5 // pred_fallthru
        _
      %p786 = scmp.le.s32.totalorder 2, %s19
      // Predicated region
      $region73: #{tpu_custom_call.1} parent=5 // pred_check
        %p787 = pneg %p786
      $region74: #{tpu_custom_call.1} parent=5 // pred_check_branch
        %789 = sbr.rel (%p787) target = $region76
      $region75: #{tpu_custom_call.1} parent=5 // pred_region
        %s790 = ssub.s32 %s19, 2
        // Predicated region
        $region77: #{tpu_custom_call.1} parent=75 // pred_check
          %p791 = pneg %p242
        $region78: #{tpu_custom_call.1} parent=75 // pred_check_branch
          %793 = sbr.rel (%p791) target = $region80
        $region79: #{tpu_custom_call.1} parent=75 // pred_region
          %p794 = scmp.lt.s32.totalorder %s25, 1
          %s795 = scalar_select %p794, %s25, 1
          %s796 = smul.addr %s795, 8
          %s797 = scalar_lea.vmem %s9, %s796
        $region80: #{tpu_custom_call.1} parent=75 // pred_fallthru
          _
      $region76: #{tpu_custom_call.1} parent=5 // pred_fallthru
        _
    $region6: #{tpu_custom_call.1} parent=1 // loop_footer
      %s23 = sadd.s32 1, %s19
    $region7: #{tpu_custom_call.1} parent=1 // loop_footer_branch
      %18 = sbr.rel target = $region3
    $region8: #{tpu_custom_call.1} parent=1 // loop_exit
      _
    %798 = vsyncpa [#allocation3], 1
    %s799 = scalar_lea.sflag [#allocation3], 1
    %800 = vsyncpa %s799, 1
    %801 = vsyncpa [#allocation5], 1

</llo_original>
